<compile_context>
chip_gen: v6e
topology: v6e:2x2x1
jax: 0.10.0
libtpu: 0.0.40
codegen_flags: <defaults>
</compile_context>

<pallas_src>
import jax
import jax.numpy as jnp
from jax.experimental import pallas as pl
from jax.experimental.pallas import tpu as pltpu

NEG_SLOPE = 0.2   # LeakyReLU negative slope from the spec
HIDDEN = 2048     # layer_sizes[1] is hard-coded to 2048 in decoder_z


def _round_up(n, m):
    return ((n + m - 1) // m) * m


def decoder_z_kernel(x_ref, w1_ref, b1_ref, w2_ref, b2_ref, o_ref):
    # fc1: (bm, L)bf16 @ (L, H)bf16 -> f32 MXU accumulate, + f32 bias
    h = jnp.dot(x_ref[...], w1_ref[...],
                preferred_element_type=jnp.float32) + b1_ref[...]
    # LeakyReLU(0.2): max(h, 0.2*h) is exact for 0 < slope < 1
    h = jnp.maximum(h, NEG_SLOPE * h)
    # fc2: cast activations to bf16 for a single-pass bf16 MXU matmul,
    # lane-dense (tn % 128 == 0) unmasked output store.
    out = jnp.dot(h.astype(jnp.bfloat16), w2_ref[...],
                  preferred_element_type=jnp.float32) + b2_ref[...]
    o_ref[...] = out.astype(o_ref.dtype)


def _choose_bm(B, cap=512):
    """Batch block size: <= cap rows, >= 2 blocks for mid/large batches so
    both v7x TensorCores get work, and padding limited to < 8 extra rows."""
    if B <= 64:
        n_blocks = 1
    else:
        n_blocks = max(2, pl.cdiv(B, cap))
    return min(cap, _round_up(pl.cdiv(B, n_blocks), 8))


def decoder_z_forward(x, params):
    """x: (B, latent_size) float32. Returns (B, output_dim) float32."""
    w1 = params["w1_bf16"]        # (latent, H)  bf16, pre-transposed
    b1 = params["b1"]             # (1, H)       f32
    w2 = params["w2_pad_bf16"]    # (H, C_pad)   bf16, lane-padded, pre-transposed
    b2 = params["b2_pad"]         # (1, C_pad)   f32, lane-padded
    out_dim = params["output_dim"]

    B, latent = x.shape
    H = w1.shape[1]
    C_pad = w2.shape[1]

    # Halve the activation DMA too: the kernel consumes bf16 x.
    x = x.astype(jnp.bfloat16)

    bm = _choose_bm(B)
    B_pad = _round_up(B, bm)
    if B_pad != B:
        x = jnp.pad(x, ((0, B_pad - B), (0, 0)))

    # Keep w2 fully resident for moderate output widths; stream it over an
    # N-tiled second grid axis when it would stress v7x's 64 MiB VMEM.
    tn = C_pad
    if C_pad > 2048:
        tn = 2048
        while C_pad % tn:
            tn -= 128
    nb, nc = B_pad // bm, C_pad // tn
    resident_w2 = nc == 1

    # Explicit scoped-VMEM budget for the chosen tiling (with buffering).
    vmem_bytes = (
        2 * bm * latent * 2                         # x blocks (bf16, 2-buf)
        + latent * H * 2                            # w1 (bf16, resident)
        + H * 4 + 2 * tn * 4                        # biases (f32)
        + (1 if resident_w2 else 2) * H * tn * 2    # w2 tile(s) (bf16)
        + 2 * bm * tn * 4                           # out blocks (f32, 2-buf)
        + 2 * bm * H * 4                            # h intermediates (slack)
    )
    vmem_limit = min(64 << 20, max(32 << 20, int(vmem_bytes * 1.5)))

    flops = 2 * B_pad * (latent * H + H * C_pad)
    bytes_accessed = (B_pad * latent * 2 + latent * H * 2 + (H + C_pad) * 4
                      + H * C_pad * 2 + B_pad * C_pad * 4)

    resident = dict(pipeline_mode=pl.Buffered(1))   # never re-fetched
    w2_mode = dict(pipeline_mode=pl.Buffered(1)) if resident_w2 else {}

    out = pl.pallas_call(
        decoder_z_kernel,
        out_shape=jax.ShapeDtypeStruct((B_pad, C_pad), jnp.float32),
        grid=(nb, nc),
        in_specs=[
            pl.BlockSpec((bm, latent), lambda i, j: (i, 0)),              # x
            pl.BlockSpec((latent, H), lambda i, j: (0, 0), **resident),   # w1
            pl.BlockSpec((1, H), lambda i, j: (0, 0), **resident),        # b1
            pl.BlockSpec((H, tn), lambda i, j: (0, j), **w2_mode),        # w2
            pl.BlockSpec((1, tn), lambda i, j: (0, j), **w2_mode),        # b2
        ],
        out_specs=pl.BlockSpec((bm, tn), lambda i, j: (i, j)),
        compiler_params=pltpu.CompilerParams(
            dimension_semantics=("parallel", "parallel"),
            vmem_limit_bytes=vmem_limit),
        cost_estimate=pl.CostEstimate(
            flops=flops, transcendentals=0, bytes_accessed=bytes_accessed),
    )(x, w1, b1, w2, b2)

    return out[:B, :out_dim]


def xavier_uniform(key, fan_in, fan_out, gain):
    # weights_init: nn.init.xavier_uniform_(weight, gain=0.5); stored as
    # (fan_in, fan_out) == transpose of the torch nn.Linear weight.
    bound = gain * (6.0 / (fan_in + fan_out)) ** 0.5
    return jax.random.uniform(key, (fan_in, fan_out), jnp.float32, -bound, bound)


def init_params(key, latent_size, output_dim, hidden=HIDDEN):
    k1, k2 = jax.random.split(key)
    w1 = xavier_uniform(k1, latent_size, hidden, gain=0.5)
    w2 = xavier_uniform(k2, hidden, output_dim, gain=0.5)

    # Lane-pad the narrow output dim once at init (128-multiple), store bf16.
    c_pad = _round_up(output_dim, 128)
    w2_pad = jnp.pad(w2, ((0, 0), (0, c_pad - output_dim)))
    return {
        "w1_bf16": w1.astype(jnp.bfloat16),
        "b1": jnp.zeros((1, hidden), jnp.float32),
        "w2_pad_bf16": w2_pad.astype(jnp.bfloat16),
        "b2_pad": jnp.zeros((1, c_pad), jnp.float32),
        "output_dim": output_dim,
    }


def reference_forward(x, params):
    # Same bf16 operand rounding / f32 accumulation as the kernel.
    out_dim = params["output_dim"]
    h = jnp.dot(x.astype(jnp.bfloat16), params["w1_bf16"],
                preferred_element_type=jnp.float32) + params["b1"]
    h = jnp.maximum(h, NEG_SLOPE * h)
    out = jnp.dot(h.astype(jnp.bfloat16),
                  params["w2_pad_bf16"][:, :out_dim],
                  preferred_element_type=jnp.float32) + params["b2_pad"][:, :out_dim]
    return out


if __name__ == "__main__":
    key = jax.random.PRNGKey(0)
    k_param, k_x = jax.random.split(key)

    B, latent_size, output_dim = 8, 32, 64   # hidden is fixed at 2048 by the spec
    params = init_params(k_param, latent_size, output_dim)

    x = jax.random.normal(k_x, (B, latent_size), jnp.float32)

    out = jax.block_until_ready(decoder_z_forward(x, params))
    ref = jax.block_until_ready(reference_forward(x, params))

    assert out.shape == (B, output_dim)
    assert jnp.allclose(out, ref, atol=1e-3, rtol=1e-3), "mismatch vs JAX reference"

    print("KERNEL_OK")
</pallas_src>

<mosaic_0001>
module attributes {stable_mosaic.version = 11 : i64} {
  func.func @decoder_z_kernel(%arg0: i32, %arg1: i32, %arg2: memref<8x32xbf16, #tpu.memory_space<vmem>>, %arg3: memref<32x2048xbf16, #tpu.memory_space<vmem>>, %arg4: memref<1x2048xf32, #tpu.memory_space<vmem>>, %arg5: memref<2048x128xbf16, #tpu.memory_space<vmem>>, %arg6: memref<1x128xf32, #tpu.memory_space<vmem>>, %arg7: memref<8x128xf32, #tpu.memory_space<vmem>>) attributes {dimension_semantics = [#tpu.dimension_semantics<parallel>, #tpu.dimension_semantics<parallel>], iteration_bounds = array<i64: 1, 1>, scalar_prefetch = 0 : i64, scratch_operands = 0 : i64, tpu.core_type = #tpu.core_type<tc>, window_params = [{transform_indices = @transform_0, window_bounds = array<i64: 8, 32>}, {pipeline_mode = #tpu.pipeline_mode<synchronous>, transform_indices = @transform_1, window_bounds = array<i64: 32, 2048>}, {pipeline_mode = #tpu.pipeline_mode<synchronous>, transform_indices = @transform_2, window_bounds = array<i64: 1, 2048>}, {pipeline_mode = #tpu.pipeline_mode<synchronous>, transform_indices = @transform_3, window_bounds = array<i64: 2048, 128>}, {pipeline_mode = #tpu.pipeline_mode<synchronous>, transform_indices = @transform_4, window_bounds = array<i64: 1, 128>}, {transform_indices = @transform_5, window_bounds = array<i64: 8, 128>}]} {
    %c0 = arith.constant 0 : index
    %c0_0 = arith.constant 0 : index
    %0 = vector.load %arg2[%c0, %c0_0] : memref<8x32xbf16, #tpu.memory_space<vmem>>, vector<8x32xbf16>
    %c0_1 = arith.constant 0 : index
    %c0_2 = arith.constant 0 : index
    %1 = vector.load %arg3[%c0_1, %c0_2] : memref<32x2048xbf16, #tpu.memory_space<vmem>>, vector<32x2048xbf16>
    %cst = arith.constant dense<0.000000e+00> : vector<8x2048xf32>
    %2 = tpu.matmul %0, %1, %cst {dimension_numbers = #tpu.dot_dimension_numbers<[1], [0], [0], [1], [0, 0, 1, 1], [], []>} : vector<8x32xbf16>, vector<32x2048xbf16>, vector<8x2048xf32> -> vector<8x2048xf32>
    %c0_3 = arith.constant 0 : index
    %c0_4 = arith.constant 0 : index
    %3 = vector.load %arg4[%c0_3, %c0_4] : memref<1x2048xf32, #tpu.memory_space<vmem>>, vector<1x2048xf32>
    %4 = vector.broadcast %3 : vector<1x2048xf32> to vector<8x2048xf32>
    %5 = arith.addf %2, %4 : vector<8x2048xf32>
    %cst_5 = arith.constant 2.000000e-01 : f32
    %6 = vector.broadcast %cst_5 : f32 to vector<8x2048xf32>
    %7 = arith.mulf %6, %5 : vector<8x2048xf32>
    %8 = arith.maximumf %5, %7 : vector<8x2048xf32>
    %9 = arith.truncf %8 : vector<8x2048xf32> to vector<8x2048xbf16>
    %c0_6 = arith.constant 0 : index
    %c0_7 = arith.constant 0 : index
    %10 = vector.load %arg5[%c0_6, %c0_7] : memref<2048x128xbf16, #tpu.memory_space<vmem>>, vector<2048x128xbf16>
    %cst_8 = arith.constant dense<0.000000e+00> : vector<8x128xf32>
    %11 = tpu.matmul %9, %10, %cst_8 {dimension_numbers = #tpu.dot_dimension_numbers<[1], [0], [0], [1], [0, 0, 1, 1], [], []>} : vector<8x2048xbf16>, vector<2048x128xbf16>, vector<8x128xf32> -> vector<8x128xf32>
    %c0_9 = arith.constant 0 : index
    %c0_10 = arith.constant 0 : index
    %12 = vector.load %arg6[%c0_9, %c0_10] : memref<1x128xf32, #tpu.memory_space<vmem>>, vector<1x128xf32>
    %13 = vector.broadcast %12 : vector<1x128xf32> to vector<8x128xf32>
    %14 = arith.addf %11, %13 : vector<8x128xf32>
    %c0_11 = arith.constant 0 : index
    %c0_12 = arith.constant 0 : index
    %15 = vector.load %arg7[%c0_11, %c0_12] : memref<8x128xf32, #tpu.memory_space<vmem>>, vector<8x128xf32>
    tpu.vector_store %arg7[%c0_11, %c0_12], %14 {strides = array<i32>} : memref<8x128xf32, #tpu.memory_space<vmem>>, vector<8x128xf32>,
    return
  }
  func.func @transform_0(%arg0: i32, %arg1: i32) -> (i32, i32) {
    %c0_i32 = arith.constant 0 : i32
    %c0_i32_0 = arith.constant 0 : i32
    return %arg0, %c0_i32 : i32, i32
  }
  func.func @transform_1(%arg0: i32, %arg1: i32) -> (i32, i32) {
    %c0_i32 = arith.constant 0 : i32
    %c0_i32_0 = arith.constant 0 : i32
    %c0_i32_1 = arith.constant 0 : i32
    return %c0_i32, %c0_i32_0 : i32, i32
  }
  func.func @transform_2(%arg0: i32, %arg1: i32) -> (i32, i32) {
    %c0_i32 = arith.constant 0 : i32
    %c0_i32_0 = arith.constant 0 : i32
    %c0_i32_1 = arith.constant 0 : i32
    return %c0_i32, %c0_i32_0 : i32, i32
  }
  func.func @transform_3(%arg0: i32, %arg1: i32) -> (i32, i32) {
    %c0_i32 = arith.constant 0 : i32
    %c0_i32_0 = arith.constant 0 : i32
    return %c0_i32, %arg1 : i32, i32
  }
  func.func @transform_4(%arg0: i32, %arg1: i32) -> (i32, i32) {
    %c0_i32 = arith.constant 0 : i32
    %c0_i32_0 = arith.constant 0 : i32
    return %c0_i32, %arg1 : i32, i32
  }
  func.func @transform_5(%arg0: i32, %arg1: i32) -> (i32, i32) {
    %c0_i32 = arith.constant 0 : i32
    return %arg0, %arg1 : i32, i32
  }
}

</mosaic_0001>

<llo_original>
// kernel: tpu_custom_call.1
$region0: #{tpu_custom_call.1}
  #allocation0 [shape = 'u32[]', space=smem, size = 0x4, offset = 0x4, fixed_abs, tag = 'smem constant byte address 0x4 - core index']
  #allocation1 [shape = 'u32[144,128]{1,0:T(1,128)}', space=vmem, size = 0x12000, scoped, tag = 'internal scratch']
  %s0 = inlined_call_operand.hbm [shape: bf16[8,32], index: 0, kind: input, shape index: {}]
  %s1 = inlined_call_operand.hbm [shape: bf16[32,2048], index: 1, kind: input, shape index: {}]
  %s2 = inlined_call_operand.hbm [shape: f32[1,2048], index: 2, kind: input, shape index: {}]
  %s3 = inlined_call_operand.hbm [shape: bf16[2048,128], index: 3, kind: input, shape index: {}]
  %s4 = inlined_call_operand.vmem [shape: f32[1,128], index: 4, kind: input, shape index: {}]
  %s5 = inlined_call_operand.hbm [shape: f32[8,128], index: 5, kind: output, shape index: {}]
  %s6 = sld [smem:[#allocation0]]
  $region46: #{tpu_custom_call.1} parent=0
    _
  %s8 = ssub.s32 1, %s6
  %s9 = scalar_select 0, %s8, %s6
  $region1: #{tpu_custom_call.1} parent=0
    #allocation2 [shape = 'u8[2048]{0}', space=vmem, size = 0x800, scoped, tag = 'input window, operand 0, single buffered']
    #allocation3 [shape = 's32[1]{0}', space=sflag, size = 0x4, scoped, tag = 'scoped memory for tpu_custom_call.1']
    #allocation4 [shape = 's32[1]{0}', space=sflag, size = 0x4, scoped, tag = 'scoped memory for tpu_custom_call.1']
    #allocation5 [shape = 'u8[131072]{0}', space=vmem, size = 0x20000, scoped, tag = 'input window, operand 1, single buffered']
    #allocation6 [shape = 's32[1]{0}', space=sflag, size = 0x4, scoped, tag = 'scoped memory for tpu_custom_call.1']
    #allocation7 [shape = 'u8[8192]{0}', space=vmem, size = 0x2000, scoped, tag = 'input window, operand 2, single buffered']
    #allocation8 [shape = 'u8[524288]{0}', space=vmem, size = 0x80000, scoped, tag = 'input window, operand 3, single buffered']
    #allocation9 [shape = 's32[1]{0}', space=sflag, size = 0x4, scoped, tag = 'scoped memory for tpu_custom_call.1']
    #allocation10 [shape = 'u8[4096]{0}', space=vmem, size = 0x1000, scoped, tag = 'output window, operand 0, single buffered']
    %10 = vsyncpa [#allocation3], 0
    %11 = vsyncpa [#allocation6], 0
    %12 = vsyncpa [#allocation9], 0
    %13 = vsyncpa [#allocation4], 0
    // Predicated region
    $region2: #{tpu_custom_call.1} parent=1 // pred_check
      _
    $region3: #{tpu_custom_call.1} parent=1 // pred_check_branch
      %15 = sbr.rel (0) target = $region5
    $region4: #{tpu_custom_call.1} parent=1 // pred_region
      %s17 = ssub.s32 64, 64
      %18 = vsyncadd [#allocation3], %s17
      %s20 = sshll.u32 [#allocation2], 4
      %s21 = int_to_ptr.vmem [resolvable:$true] %s20
      %23 = dma.hbm_to_vmem [thread:$0]  %s0, 64, %s21, [#allocation3]
    $region5: #{tpu_custom_call.1} parent=1 // pred_fallthru
      _
    // Predicated region
    $region6: #{tpu_custom_call.1} parent=1 // pred_check
      _
    $region7: #{tpu_custom_call.1} parent=1 // pred_check_branch
      %25 = sbr.rel (0) target = $region9
    $region8: #{tpu_custom_call.1} parent=1 // pred_region
      %s27 = ssub.s32 4096, 4096
      %28 = vsyncadd [#allocation6], %s27
      %s29 = sshll.u32 [#allocation5], 4
      %s30 = int_to_ptr.vmem [resolvable:$true] %s29
      %35 = dma.hbm_to_vmem [thread:$0]  %s1, 4096, %s30, [#allocation6], 1024, 1024, 64
    $region9: #{tpu_custom_call.1} parent=1 // pred_fallthru
      _
    // Predicated region
    $region10: #{tpu_custom_call.1} parent=1 // pred_check
      _
    $region11: #{tpu_custom_call.1} parent=1 // pred_check_branch
      %37 = sbr.rel (0) target = $region13
    $region12: #{tpu_custom_call.1} parent=1 // pred_region
      %s39 = ssub.s32 256, 256
      %40 = vsyncadd [#allocation6], %s39
      %s42 = sshll.u32 [#allocation7], 4
      %s43 = int_to_ptr.vmem [resolvable:$true] %s42
      %45 = dma.hbm_to_vmem [thread:$0]  %s2, 256, %s43, [#allocation6]
    $region13: #{tpu_custom_call.1} parent=1 // pred_fallthru
      _
    // Predicated region
    $region14: #{tpu_custom_call.1} parent=1 // pred_check
      _
    $region15: #{tpu_custom_call.1} parent=1 // pred_check_branch
      %47 = sbr.rel (0) target = $region17
    $region16: #{tpu_custom_call.1} parent=1 // pred_region
      %s49 = ssub.s32 16384, 16384
      %50 = vsyncadd [#allocation9], %s49
      %s51 = sshll.u32 [#allocation8], 4
      %s52 = int_to_ptr.vmem [resolvable:$true] %s51
      %57 = dma.hbm_to_vmem [thread:$0]  %s3, 16384, %s52, [#allocation9], 64, 64, 4
    $region17: #{tpu_custom_call.1} parent=1 // pred_fallthru
      _
    // Predicated region
    $region18: #{tpu_custom_call.1} parent=1 // pred_check
      _
    $region19: #{tpu_custom_call.1} parent=1 // pred_check_branch
      %59 = sbr.rel (0) target = $region21
    $region20: #{tpu_custom_call.1} parent=1 // pred_region
      _
    $region21: #{tpu_custom_call.1} parent=1 // pred_fallthru
      _
    // Predicated region
    $region22: #{tpu_custom_call.1} parent=1 // pred_check
      _
    $region23: #{tpu_custom_call.1} parent=1 // pred_check_branch
      %61 = sbr.rel (0) target = $region25
    $region24: #{tpu_custom_call.1} parent=1 // pred_region
      %62 = dma.done [#allocation3], 64
    $region25: #{tpu_custom_call.1} parent=1 // pred_fallthru
      _
    // Predicated region
    $region26: #{tpu_custom_call.1} parent=1 // pred_check
      _
    $region27: #{tpu_custom_call.1} parent=1 // pred_check_branch
      %64 = sbr.rel (0) target = $region29
    $region28: #{tpu_custom_call.1} parent=1 // pred_region
      %65 = dma.done [#allocation6], 4096
    $region29: #{tpu_custom_call.1} parent=1 // pred_fallthru
      _
    // Predicated region
    $region30: #{tpu_custom_call.1} parent=1 // pred_check
      _
    $region31: #{tpu_custom_call.1} parent=1 // pred_check_branch
      %67 = sbr.rel (0) target = $region33
    $region32: #{tpu_custom_call.1} parent=1 // pred_region
      %68 = dma.done [#allocation6], 256
    $region33: #{tpu_custom_call.1} parent=1 // pred_fallthru
      _
    // Predicated region
    $region34: #{tpu_custom_call.1} parent=1 // pred_check
      _
    $region35: #{tpu_custom_call.1} parent=1 // pred_check_branch
      %70 = sbr.rel (0) target = $region37
    $region36: #{tpu_custom_call.1} parent=1 // pred_region
      %71 = dma.done [#allocation9], 16384
    $region37: #{tpu_custom_call.1} parent=1 // pred_fallthru
      _
    %v73 = vld [vmem:[#allocation2] sm:$0xf]
    %v74 = vld [vmem:[#allocation5] sm:$0xff]
    %v75 = vld [vmem:[#allocation5 + $0x8] sm:$0xff]
    %v76 = vld [vmem:[#allocation5 + $0x10] sm:$0xff]
    %v77 = vld [vmem:[#allocation5 + $0x18] sm:$0xff]
    %v78 = vld [vmem:[#allocation5 + $0x20] sm:$0xff]
    %v79 = vld [vmem:[#allocation5 + $0x28] sm:$0xff]
    %v80 = vld [vmem:[#allocation5 + $0x30] sm:$0xff]
    %v81 = vld [vmem:[#allocation5 + $0x38] sm:$0xff]
    %v82 = vld [vmem:[#allocation5 + $0x40] sm:$0xff]
    %v83 = vld [vmem:[#allocation5 + $0x48] sm:$0xff]
    %v84 = vld [vmem:[#allocation5 + $0x50] sm:$0xff]
    %v85 = vld [vmem:[#allocation5 + $0x58] sm:$0xff]
    %v86 = vld [vmem:[#allocation5 + $0x60] sm:$0xff]
    %v87 = vld [vmem:[#allocation5 + $0x68] sm:$0xff]
    %v88 = vld [vmem:[#allocation5 + $0x70] sm:$0xff]
    %v89 = vld [vmem:[#allocation5 + $0x78] sm:$0xff]
    %v90 = vld [vmem:[#allocation5 + $0x80] sm:$0xff]
    %v91 = vld [vmem:[#allocation5 + $0x88] sm:$0xff]
    %v92 = vld [vmem:[#allocation5 + $0x90] sm:$0xff]
    %v93 = vld [vmem:[#allocation5 + $0x98] sm:$0xff]
    %v94 = vld [vmem:[#allocation5 + $0xa0] sm:$0xff]
    %v95 = vld [vmem:[#allocation5 + $0xa8] sm:$0xff]
    %v96 = vld [vmem:[#allocation5 + $0xb0] sm:$0xff]
    %v97 = vld [vmem:[#allocation5 + $0xb8] sm:$0xff]
    %v98 = vld [vmem:[#allocation5 + $0xc0] sm:$0xff]
    %v99 = vld [vmem:[#allocation5 + $0xc8] sm:$0xff]
    %v100 = vld [vmem:[#allocation5 + $0xd0] sm:$0xff]
    %v101 = vld [vmem:[#allocation5 + $0xd8] sm:$0xff]
    %v102 = vld [vmem:[#allocation5 + $0xe0] sm:$0xff]
    %v103 = vld [vmem:[#allocation5 + $0xe8] sm:$0xff]
    %v104 = vld [vmem:[#allocation5 + $0xf0] sm:$0xff]
    %v105 = vld [vmem:[#allocation5 + $0xf8] sm:$0xff]
    %v106 = vld [vmem:[#allocation7] sm:$0xff]
    %v107 = vld [vmem:[#allocation7 + $0x8] sm:$0xff]
    %v110 = vlaneseq
    %v111 = vshrl.u32 %v110, 7
    %v112 = vsub.s32 0, %v111
    %v113 = vrot.slane %v106, %v112
    %v114 = vlaneseq
    %v115 = vshrl.u32 %v114, 7
    %v116 = vsub.s32 1, %v115
    %v117 = vrot.slane %v106, %v116
    %v118 = vlaneseq
    %v119 = vshrl.u32 %v118, 7
    %v120 = vsub.s32 2, %v119
    %v121 = vrot.slane %v106, %v120
    %v122 = vlaneseq
    %v123 = vshrl.u32 %v122, 7
    %v124 = vsub.s32 3, %v123
    %v125 = vrot.slane %v106, %v124
    %v126 = vlaneseq
    %v127 = vshrl.u32 %v126, 7
    %v128 = vsub.s32 4, %v127
    %v129 = vrot.slane %v106, %v128
    %v130 = vlaneseq
    %v131 = vshrl.u32 %v130, 7
    %v132 = vsub.s32 5, %v131
    %v133 = vrot.slane %v106, %v132
    %v134 = vlaneseq
    %v135 = vshrl.u32 %v134, 7
    %v136 = vsub.s32 6, %v135
    %v137 = vrot.slane %v106, %v136
    %v138 = vlaneseq
    %v139 = vshrl.u32 %v138, 7
    %v140 = vsub.s32 7, %v139
    %v141 = vrot.slane %v106, %v140
    %v142 = vlaneseq
    %v143 = vshrl.u32 %v142, 7
    %v144 = vsub.s32 0, %v143
    %v145 = vrot.slane %v107, %v144
    %v146 = vlaneseq
    %v147 = vshrl.u32 %v146, 7
    %v148 = vsub.s32 1, %v147
    %v149 = vrot.slane %v107, %v148
    %v150 = vlaneseq
    %v151 = vshrl.u32 %v150, 7
    %v152 = vsub.s32 2, %v151
    %v153 = vrot.slane %v107, %v152
    %v154 = vlaneseq
    %v155 = vshrl.u32 %v154, 7
    %v156 = vsub.s32 3, %v155
    %v157 = vrot.slane %v107, %v156
    %v158 = vlaneseq
    %v159 = vshrl.u32 %v158, 7
    %v160 = vsub.s32 4, %v159
    %v161 = vrot.slane %v107, %v160
    %v162 = vlaneseq
    %v163 = vshrl.u32 %v162, 7
    %v164 = vsub.s32 5, %v163
    %v165 = vrot.slane %v107, %v164
    %v166 = vlaneseq
    %v167 = vshrl.u32 %v166, 7
    %v168 = vsub.s32 6, %v167
    %v169 = vrot.slane %v107, %v168
    %v170 = vlaneseq
    %v171 = vshrl.u32 %v170, 7
    %v172 = vsub.s32 7, %v171
    %v173 = vrot.slane %v107, %v172
    %v222 = vunpack.c.l.b16 %v74
    %v223 = vunpack.c.h.b16 %v74
    %v224 = vunpack.c.l.b16 %v75
    %v225 = vunpack.c.h.b16 %v75
    %v226 = vunpack.c.l.b16 %v76
    %v227 = vunpack.c.h.b16 %v76
    %v228 = vunpack.c.l.b16 %v77
    %v229 = vunpack.c.h.b16 %v77
    %v230 = vunpack.c.l.b16 %v78
    %v231 = vunpack.c.h.b16 %v78
    %v232 = vunpack.c.l.b16 %v79
    %v233 = vunpack.c.h.b16 %v79
    %v234 = vunpack.c.l.b16 %v80
    %v235 = vunpack.c.h.b16 %v80
    %v236 = vunpack.c.l.b16 %v81
    %v237 = vunpack.c.h.b16 %v81
    %v238 = vunpack.c.l.b16 %v82
    %v239 = vunpack.c.h.b16 %v82
    %v240 = vunpack.c.l.b16 %v83
    %v241 = vunpack.c.h.b16 %v83
    %v242 = vunpack.c.l.b16 %v84
    %v243 = vunpack.c.h.b16 %v84
    %v244 = vunpack.c.l.b16 %v85
    %v245 = vunpack.c.h.b16 %v85
    %v246 = vunpack.c.l.b16 %v86
    %v247 = vunpack.c.h.b16 %v86
    %v248 = vunpack.c.l.b16 %v87
    %v249 = vunpack.c.h.b16 %v87
    %v250 = vunpack.c.l.b16 %v88
    %v251 = vunpack.c.h.b16 %v88
    %v252 = vunpack.c.l.b16 %v89
    %v253 = vunpack.c.h.b16 %v89
    %v254 = vunpack.c.l.b16 %v90
    %v255 = vunpack.c.h.b16 %v90
    %v256 = vunpack.c.l.b16 %v91
    %v257 = vunpack.c.h.b16 %v91
    %v258 = vunpack.c.l.b16 %v92
    %v259 = vunpack.c.h.b16 %v92
    %v260 = vunpack.c.l.b16 %v93
    %v261 = vunpack.c.h.b16 %v93
    %v262 = vunpack.c.l.b16 %v94
    %v263 = vunpack.c.h.b16 %v94
    %v264 = vunpack.c.l.b16 %v95
    %v265 = vunpack.c.h.b16 %v95
    %v266 = vunpack.c.l.b16 %v96
    %v267 = vunpack.c.h.b16 %v96
    %v268 = vunpack.c.l.b16 %v97
    %v269 = vunpack.c.h.b16 %v97
    %v270 = vunpack.c.l.b16 %v98
    %v271 = vunpack.c.h.b16 %v98
    %v272 = vunpack.c.l.b16 %v99
    %v273 = vunpack.c.h.b16 %v99
    %v274 = vunpack.c.l.b16 %v100
    %v275 = vunpack.c.h.b16 %v100
    %v276 = vunpack.c.l.b16 %v101
    %v277 = vunpack.c.h.b16 %v101
    %v278 = vunpack.c.l.b16 %v102
    %v279 = vunpack.c.h.b16 %v102
    %v280 = vunpack.c.l.b16 %v103
    %v281 = vunpack.c.h.b16 %v103
    %v282 = vunpack.c.l.b16 %v104
    %v283 = vunpack.c.h.b16 %v104
    %v284 = vunpack.c.l.b16 %v105
    %v285 = vunpack.c.h.b16 %v105
    %v286 = vpack.c.b16 %v238, %v222
    %v287 = vpack.c.b16 %v239, %v223
    %v288 = vpack.c.b16 %v240, %v224
    %v289 = vpack.c.b16 %v241, %v225
    %v290 = vpack.c.b16 %v242, %v226
    %v291 = vpack.c.b16 %v243, %v227
    %v292 = vpack.c.b16 %v244, %v228
    %v293 = vpack.c.b16 %v245, %v229
    %v294 = vpack.c.b16 %v246, %v230
    %v295 = vpack.c.b16 %v247, %v231
    %v296 = vpack.c.b16 %v248, %v232
    %v297 = vpack.c.b16 %v249, %v233
    %v298 = vpack.c.b16 %v250, %v234
    %v299 = vpack.c.b16 %v251, %v235
    %v300 = vpack.c.b16 %v252, %v236
    %v301 = vpack.c.b16 %v253, %v237
    %v302 = vpack.c.b16 %v270, %v254
    %v303 = vpack.c.b16 %v271, %v255
    %v304 = vpack.c.b16 %v272, %v256
    %v305 = vpack.c.b16 %v273, %v257
    %v306 = vpack.c.b16 %v274, %v258
    %v307 = vpack.c.b16 %v275, %v259
    %v308 = vpack.c.b16 %v276, %v260
    %v309 = vpack.c.b16 %v277, %v261
    %v310 = vpack.c.b16 %v278, %v262
    %v311 = vpack.c.b16 %v279, %v263
    %v312 = vpack.c.b16 %v280, %v264
    %v313 = vpack.c.b16 %v281, %v265
    %v314 = vpack.c.b16 %v282, %v266
    %v315 = vpack.c.b16 %v283, %v267
    %v316 = vpack.c.b16 %v284, %v268
    %v317 = vpack.c.b16 %v285, %v269
    %vm350 = vcmask 261120
    %v352 = vsel %vm350, %v73, 0
    %354 = vmatprep.subr.bf16.mxu0 0
    %355 = vmatpush1.bf16.msra.mxu0 0
    %356 = vmatprep.subr.bf16.mxu0 0
    %357 = vmatpush1.bf16.msra.mxu0 0
    %358 = vmatprep.subr.bf16.mxu0 0
    %359 = vmatpush1.bf16.msra.mxu0 0
    %360 = vmatprep.subr.bf16.mxu0 0
    %361 = vmatpush1.bf16.msra.mxu0 0
    %362 = vmatprep.subr.bf16.mxu0 0
    %363 = vmatpush1.bf16.msra.mxu0 0
    %364 = vmatprep.subr.bf16.mxu0 0
    %365 = vmatpush1.bf16.msra.mxu0 0
    %366 = vmatprep.subr.bf16.mxu0 %v303
    %367 = vmatpush1.bf16.msra.mxu0 %v302
    %368 = vmatprep.subr.bf16.mxu0 %v287
    %369 = vmatpush1.bf16.msra.mxu0 %v286
    %370 = vmatprep.subr.bf16.mxu0 0
    %371 = vmatpush2.bf16.msra.mxu0 0
    %372 = vmatprep.subr.bf16.mxu0 0
    %373 = vmatpush2.bf16.msra.mxu0 0
    %374 = vmatprep.subr.bf16.mxu0 0
    %375 = vmatpush2.bf16.msra.mxu0 0
    %376 = vmatprep.subr.bf16.mxu0 0
    %377 = vmatpush2.bf16.msra.mxu0 0
    %378 = vmatprep.subr.bf16.mxu0 0
    %379 = vmatpush2.bf16.msra.mxu0 0
    %380 = vmatprep.subr.bf16.mxu0 0
    %381 = vmatpush2.bf16.msra.mxu0 0
    %382 = vmatprep.subr.bf16.mxu0 0
    %383 = vmatpush2.bf16.msra.mxu0 0
    %384 = vmatprep.subr.bf16.mxu0 0
    %385 = vmatpush2.bf16.msra.mxu0 0
    %386 = vmatprep.mubr.bf16.mxu0 0
    %387 = vmatmul.mubr.bf16.gmra.mxu0 %v352
    %v388 = vpop.f32.mrf.mxu0
    %v389 = vadd.f32 %v113, %v388
    %v390 = vpop.f32.mrf.mxu0
    %v391 = vadd.f32 %v117, %v390
    %v392 = vpop.f32.mrf.mxu0
    %v393 = vpop.f32.mrf.mxu0
    %394 = vdwg.mxu0
    %395 = vmatprep.subr.bf16.mxu0 0
    %396 = vmatpush1.bf16.msra.mxu0 0
    %397 = vmatprep.subr.bf16.mxu0 0
    %398 = vmatpush1.bf16.msra.mxu0 0
    %399 = vmatprep.subr.bf16.mxu0 0
    %400 = vmatpush1.bf16.msra.mxu0 0
    %401 = vmatprep.subr.bf16.mxu0 0
    %402 = vmatpush1.bf16.msra.mxu0 0
    %403 = vmatprep.subr.bf16.mxu0 0
    %404 = vmatpush1.bf16.msra.mxu0 0
    %405 = vmatprep.subr.bf16.mxu0 0
    %406 = vmatpush1.bf16.msra.mxu0 0
    %407 = vmatprep.subr.bf16.mxu0 %v305
    %408 = vmatpush1.bf16.msra.mxu0 %v304
    %409 = vmatprep.subr.bf16.mxu0 %v289
    %410 = vmatpush1.bf16.msra.mxu0 %v288
    %411 = vmatprep.subr.bf16.mxu0 0
    %412 = vmatpush2.bf16.msra.mxu0 0
    %413 = vmatprep.subr.bf16.mxu0 0
    %414 = vmatpush2.bf16.msra.mxu0 0
    %415 = vmatprep.subr.bf16.mxu0 0
    %416 = vmatpush2.bf16.msra.mxu0 0
    %417 = vmatprep.subr.bf16.mxu0 0
    %418 = vmatpush2.bf16.msra.mxu0 0
    %419 = vmatprep.subr.bf16.mxu0 0
    %420 = vmatpush2.bf16.msra.mxu0 0
    %421 = vmatprep.subr.bf16.mxu0 0
    %422 = vmatpush2.bf16.msra.mxu0 0
    %423 = vmatprep.subr.bf16.mxu0 0
    %424 = vmatpush2.bf16.msra.mxu0 0
    %425 = vmatprep.subr.bf16.mxu0 0
    %426 = vmatpush2.bf16.msra.mxu0 0
    %427 = vmatprep.mubr.bf16.mxu0 0
    %428 = vmatmul.mubr.bf16.gmra.mxu0 %v352
    %v429 = vpop.f32.mrf.mxu0
    %v430 = vadd.f32 %v121, %v429
    %v431 = vpop.f32.mrf.mxu0
    %v432 = vadd.f32 %v125, %v431
    %v433 = vpop.f32.mrf.mxu0
    %v434 = vpop.f32.mrf.mxu0
    %435 = vdwg.mxu0
    %436 = vmatprep.subr.bf16.mxu0 0
    %437 = vmatpush1.bf16.msra.mxu0 0
    %438 = vmatprep.subr.bf16.mxu0 0
    %439 = vmatpush1.bf16.msra.mxu0 0
    %440 = vmatprep.subr.bf16.mxu0 0
    %441 = vmatpush1.bf16.msra.mxu0 0
    %442 = vmatprep.subr.bf16.mxu0 0
    %443 = vmatpush1.bf16.msra.mxu0 0
    %444 = vmatprep.subr.bf16.mxu0 0
    %445 = vmatpush1.bf16.msra.mxu0 0
    %446 = vmatprep.subr.bf16.mxu0 0
    %447 = vmatpush1.bf16.msra.mxu0 0
    %448 = vmatprep.subr.bf16.mxu0 %v307
    %449 = vmatpush1.bf16.msra.mxu0 %v306
    %450 = vmatprep.subr.bf16.mxu0 %v291
    %451 = vmatpush1.bf16.msra.mxu0 %v290
    %452 = vmatprep.subr.bf16.mxu0 0
    %453 = vmatpush2.bf16.msra.mxu0 0
    %454 = vmatprep.subr.bf16.mxu0 0
    %455 = vmatpush2.bf16.msra.mxu0 0
    %456 = vmatprep.subr.bf16.mxu0 0
    %457 = vmatpush2.bf16.msra.mxu0 0
    %458 = vmatprep.subr.bf16.mxu0 0
    %459 = vmatpush2.bf16.msra.mxu0 0
    %460 = vmatprep.subr.bf16.mxu0 0
    %461 = vmatpush2.bf16.msra.mxu0 0
    %462 = vmatprep.subr.bf16.mxu0 0
    %463 = vmatpush2.bf16.msra.mxu0 0
    %464 = vmatprep.subr.bf16.mxu0 0
    %465 = vmatpush2.bf16.msra.mxu0 0
    %466 = vmatprep.subr.bf16.mxu0 0
    %467 = vmatpush2.bf16.msra.mxu0 0
    %468 = vmatprep.mubr.bf16.mxu0 0
    %469 = vmatmul.mubr.bf16.gmra.mxu0 %v352
    %v470 = vpop.f32.mrf.mxu0
    %v471 = vadd.f32 %v129, %v470
    %v472 = vpop.f32.mrf.mxu0
    %v473 = vadd.f32 %v133, %v472
    %v474 = vpop.f32.mrf.mxu0
    %v475 = vpop.f32.mrf.mxu0
    %476 = vdwg.mxu0
    %477 = vmatprep.subr.bf16.mxu0 0
    %478 = vmatpush1.bf16.msra.mxu0 0
    %479 = vmatprep.subr.bf16.mxu0 0
    %480 = vmatpush1.bf16.msra.mxu0 0
    %481 = vmatprep.subr.bf16.mxu0 0
    %482 = vmatpush1.bf16.msra.mxu0 0
    %483 = vmatprep.subr.bf16.mxu0 0
    %484 = vmatpush1.bf16.msra.mxu0 0
    %485 = vmatprep.subr.bf16.mxu0 0
    %486 = vmatpush1.bf16.msra.mxu0 0
    %487 = vmatprep.subr.bf16.mxu0 0
    %488 = vmatpush1.bf16.msra.mxu0 0
    %489 = vmatprep.subr.bf16.mxu0 %v309
    %490 = vmatpush1.bf16.msra.mxu0 %v308
    %491 = vmatprep.subr.bf16.mxu0 %v293
    %492 = vmatpush1.bf16.msra.mxu0 %v292
    %493 = vmatprep.subr.bf16.mxu0 0
    %494 = vmatpush2.bf16.msra.mxu0 0
    %495 = vmatprep.subr.bf16.mxu0 0
    %496 = vmatpush2.bf16.msra.mxu0 0
    %497 = vmatprep.subr.bf16.mxu0 0
    %498 = vmatpush2.bf16.msra.mxu0 0
    %499 = vmatprep.subr.bf16.mxu0 0
    %500 = vmatpush2.bf16.msra.mxu0 0
    %501 = vmatprep.subr.bf16.mxu0 0
    %502 = vmatpush2.bf16.msra.mxu0 0
    %503 = vmatprep.subr.bf16.mxu0 0
    %504 = vmatpush2.bf16.msra.mxu0 0
    %505 = vmatprep.subr.bf16.mxu0 0
    %506 = vmatpush2.bf16.msra.mxu0 0
    %507 = vmatprep.subr.bf16.mxu0 0
    %508 = vmatpush2.bf16.msra.mxu0 0
    %509 = vmatprep.mubr.bf16.mxu0 0
    %510 = vmatmul.mubr.bf16.gmra.mxu0 %v352
    %v511 = vpop.f32.mrf.mxu0
    %v512 = vadd.f32 %v137, %v511
    %v513 = vpop.f32.mrf.mxu0
    %v514 = vadd.f32 %v141, %v513
    %v515 = vpop.f32.mrf.mxu0
    %v516 = vpop.f32.mrf.mxu0
    %517 = vdwg.mxu0
    %518 = vmatprep.subr.bf16.mxu0 0
    %519 = vmatpush1.bf16.msra.mxu0 0
    %520 = vmatprep.subr.bf16.mxu0 0
    %521 = vmatpush1.bf16.msra.mxu0 0
    %522 = vmatprep.subr.bf16.mxu0 0
    %523 = vmatpush1.bf16.msra.mxu0 0
    %524 = vmatprep.subr.bf16.mxu0 0
    %525 = vmatpush1.bf16.msra.mxu0 0
    %526 = vmatprep.subr.bf16.mxu0 0
    %527 = vmatpush1.bf16.msra.mxu0 0
    %528 = vmatprep.subr.bf16.mxu0 0
    %529 = vmatpush1.bf16.msra.mxu0 0
    %530 = vmatprep.subr.bf16.mxu0 %v311
    %531 = vmatpush1.bf16.msra.mxu0 %v310
    %532 = vmatprep.subr.bf16.mxu0 %v295
    %533 = vmatpush1.bf16.msra.mxu0 %v294
    %534 = vmatprep.subr.bf16.mxu0 0
    %535 = vmatpush2.bf16.msra.mxu0 0
    %536 = vmatprep.subr.bf16.mxu0 0
    %537 = vmatpush2.bf16.msra.mxu0 0
    %538 = vmatprep.subr.bf16.mxu0 0
    %539 = vmatpush2.bf16.msra.mxu0 0
    %540 = vmatprep.subr.bf16.mxu0 0
    %541 = vmatpush2.bf16.msra.mxu0 0
    %542 = vmatprep.subr.bf16.mxu0 0
    %543 = vmatpush2.bf16.msra.mxu0 0
    %544 = vmatprep.subr.bf16.mxu0 0
    %545 = vmatpush2.bf16.msra.mxu0 0
    %546 = vmatprep.subr.bf16.mxu0 0
    %547 = vmatpush2.bf16.msra.mxu0 0
    %548 = vmatprep.subr.bf16.mxu0 0
    %549 = vmatpush2.bf16.msra.mxu0 0
    %550 = vmatprep.mubr.bf16.mxu0 0
    %551 = vmatmul.mubr.bf16.gmra.mxu0 %v352
    %v552 = vpop.f32.mrf.mxu0
    %v553 = vadd.f32 %v145, %v552
    %v554 = vpop.f32.mrf.mxu0
    %v555 = vadd.f32 %v149, %v554
    %v556 = vpop.f32.mrf.mxu0
    %v557 = vpop.f32.mrf.mxu0
    %558 = vdwg.mxu0
    %559 = vmatprep.subr.bf16.mxu0 0
    %560 = vmatpush1.bf16.msra.mxu0 0
    %561 = vmatprep.subr.bf16.mxu0 0
    %562 = vmatpush1.bf16.msra.mxu0 0
    %563 = vmatprep.subr.bf16.mxu0 0
    %564 = vmatpush1.bf16.msra.mxu0 0
    %565 = vmatprep.subr.bf16.mxu0 0
    %566 = vmatpush1.bf16.msra.mxu0 0
    %567 = vmatprep.subr.bf16.mxu0 0
    %568 = vmatpush1.bf16.msra.mxu0 0
    %569 = vmatprep.subr.bf16.mxu0 0
    %570 = vmatpush1.bf16.msra.mxu0 0
    %571 = vmatprep.subr.bf16.mxu0 %v313
    %572 = vmatpush1.bf16.msra.mxu0 %v312
    %573 = vmatprep.subr.bf16.mxu0 %v297
    %574 = vmatpush1.bf16.msra.mxu0 %v296
    %575 = vmatprep.subr.bf16.mxu0 0
    %576 = vmatpush2.bf16.msra.mxu0 0
    %577 = vmatprep.subr.bf16.mxu0 0
    %578 = vmatpush2.bf16.msra.mxu0 0
    %579 = vmatprep.subr.bf16.mxu0 0
    %580 = vmatpush2.bf16.msra.mxu0 0
    %581 = vmatprep.subr.bf16.mxu0 0
    %582 = vmatpush2.bf16.msra.mxu0 0
    %583 = vmatprep.subr.bf16.mxu0 0
    %584 = vmatpush2.bf16.msra.mxu0 0
    %585 = vmatprep.subr.bf16.mxu0 0
    %586 = vmatpush2.bf16.msra.mxu0 0
    %587 = vmatprep.subr.bf16.mxu0 0
    %588 = vmatpush2.bf16.msra.mxu0 0
    %589 = vmatprep.subr.bf16.mxu0 0
    %590 = vmatpush2.bf16.msra.mxu0 0
    %591 = vmatprep.mubr.bf16.mxu0 0
    %592 = vmatmul.mubr.bf16.gmra.mxu0 %v352
    %v593 = vpop.f32.mrf.mxu0
    %v594 = vadd.f32 %v153, %v593
    %v595 = vpop.f32.mrf.mxu0
    %v596 = vadd.f32 %v157, %v595
    %v597 = vpop.f32.mrf.mxu0
    %v598 = vpop.f32.mrf.mxu0
    %599 = vdwg.mxu0
    %600 = vmatprep.subr.bf16.mxu0 0
    %601 = vmatpush1.bf16.msra.mxu0 0
    %602 = vmatprep.subr.bf16.mxu0 0
    %603 = vmatpush1.bf16.msra.mxu0 0
    %604 = vmatprep.subr.bf16.mxu0 0
    %605 = vmatpush1.bf16.msra.mxu0 0
    %606 = vmatprep.subr.bf16.mxu0 0
    %607 = vmatpush1.bf16.msra.mxu0 0
    %608 = vmatprep.subr.bf16.mxu0 0
    %609 = vmatpush1.bf16.msra.mxu0 0
    %610 = vmatprep.subr.bf16.mxu0 0
    %611 = vmatpush1.bf16.msra.mxu0 0
    %612 = vmatprep.subr.bf16.mxu0 %v315
    %613 = vmatpush1.bf16.msra.mxu0 %v314
    %614 = vmatprep.subr.bf16.mxu0 %v299
    %615 = vmatpush1.bf16.msra.mxu0 %v298
    %616 = vmatprep.subr.bf16.mxu0 0
    %617 = vmatpush2.bf16.msra.mxu0 0
    %618 = vmatprep.subr.bf16.mxu0 0
    %619 = vmatpush2.bf16.msra.mxu0 0
    %620 = vmatprep.subr.bf16.mxu0 0
    %621 = vmatpush2.bf16.msra.mxu0 0
    %622 = vmatprep.subr.bf16.mxu0 0
    %623 = vmatpush2.bf16.msra.mxu0 0
    %624 = vmatprep.subr.bf16.mxu0 0
    %625 = vmatpush2.bf16.msra.mxu0 0
    %626 = vmatprep.subr.bf16.mxu0 0
    %627 = vmatpush2.bf16.msra.mxu0 0
    %628 = vmatprep.subr.bf16.mxu0 0
    %629 = vmatpush2.bf16.msra.mxu0 0
    %630 = vmatprep.subr.bf16.mxu0 0
    %631 = vmatpush2.bf16.msra.mxu0 0
    %632 = vmatprep.mubr.bf16.mxu0 0
    %633 = vmatmul.mubr.bf16.gmra.mxu0 %v352
    %v634 = vpop.f32.mrf.mxu0
    %v635 = vadd.f32 %v161, %v634
    %v636 = vpop.f32.mrf.mxu0
    %v637 = vadd.f32 %v165, %v636
    %v638 = vpop.f32.mrf.mxu0
    %v639 = vpop.f32.mrf.mxu0
    %640 = vdwg.mxu0
    %641 = vmatprep.subr.bf16.mxu0 0
    %642 = vmatpush1.bf16.msra.mxu0 0
    %643 = vmatprep.subr.bf16.mxu0 0
    %644 = vmatpush1.bf16.msra.mxu0 0
    %645 = vmatprep.subr.bf16.mxu0 0
    %646 = vmatpush1.bf16.msra.mxu0 0
    %647 = vmatprep.subr.bf16.mxu0 0
    %648 = vmatpush1.bf16.msra.mxu0 0
    %649 = vmatprep.subr.bf16.mxu0 0
    %650 = vmatpush1.bf16.msra.mxu0 0
    %651 = vmatprep.subr.bf16.mxu0 0
    %652 = vmatpush1.bf16.msra.mxu0 0
    %653 = vmatprep.subr.bf16.mxu0 %v317
    %654 = vmatpush1.bf16.msra.mxu0 %v316
    %655 = vmatprep.subr.bf16.mxu0 %v301
    %656 = vmatpush1.bf16.msra.mxu0 %v300
    %657 = vmatprep.subr.bf16.mxu0 0
    %658 = vmatpush2.bf16.msra.mxu0 0
    %659 = vmatprep.subr.bf16.mxu0 0
    %660 = vmatpush2.bf16.msra.mxu0 0
    %661 = vmatprep.subr.bf16.mxu0 0
    %662 = vmatpush2.bf16.msra.mxu0 0
    %663 = vmatprep.subr.bf16.mxu0 0
    %664 = vmatpush2.bf16.msra.mxu0 0
    %665 = vmatprep.subr.bf16.mxu0 0
    %666 = vmatpush2.bf16.msra.mxu0 0
    %667 = vmatprep.subr.bf16.mxu0 0
    %668 = vmatpush2.bf16.msra.mxu0 0
    %669 = vmatprep.subr.bf16.mxu0 0
    %670 = vmatpush2.bf16.msra.mxu0 0
    %671 = vmatprep.subr.bf16.mxu0 0
    %672 = vmatpush2.bf16.msra.mxu0 0
    %673 = vmatprep.mubr.bf16.mxu0 0
    %674 = vmatmul.mubr.bf16.gmra.mxu0 %v352
    %v675 = vpop.f32.mrf.mxu0
    %v676 = vadd.f32 %v169, %v675
    %v677 = vpop.f32.mrf.mxu0
    %v678 = vadd.f32 %v173, %v677
    %v679 = vpop.f32.mrf.mxu0
    %v680 = vpop.f32.mrf.mxu0
    %681 = vdwg.mxu0
    %v682 = vmul.f32 %v389, 0.2
    %v683 = vmul.f32 %v391, 0.2
    %v684 = vmul.f32 %v430, 0.2
    %v685 = vmul.f32 %v432, 0.2
    %v686 = vmul.f32 %v471, 0.2
    %v687 = vmul.f32 %v473, 0.2
    %v688 = vmul.f32 %v512, 0.2
    %v689 = vmul.f32 %v514, 0.2
    %v690 = vmul.f32 %v553, 0.2
    %v691 = vmul.f32 %v555, 0.2
    %v692 = vmul.f32 %v594, 0.2
    %v693 = vmul.f32 %v596, 0.2
    %v694 = vmul.f32 %v635, 0.2
    %v695 = vmul.f32 %v637, 0.2
    %v696 = vmul.f32 %v676, 0.2
    %v697 = vmul.f32 %v678, 0.2
    %v698 = vmax.f32 %v389, %v682
    %v699 = vmax.f32 %v391, %v683
    %v700 = vmax.f32 %v430, %v684
    %v701 = vmax.f32 %v432, %v685
    %v702 = vmax.f32 %v471, %v686
    %v703 = vmax.f32 %v473, %v687
    %v704 = vmax.f32 %v512, %v688
    %v705 = vmax.f32 %v514, %v689
    %v706 = vmax.f32 %v553, %v690
    %v707 = vmax.f32 %v555, %v691
    %v708 = vmax.f32 %v594, %v692
    %v709 = vmax.f32 %v596, %v693
    %v710 = vmax.f32 %v635, %v694
    %v711 = vmax.f32 %v637, %v695
    %v712 = vmax.f32 %v676, %v696
    %v713 = vmax.f32 %v678, %v697
    %v714 = vpack.c.bf16 %v698, %v698
    %v715 = vpack.c.bf16 %v699, %v699
    %v716 = vpack.c.bf16 %v700, %v700
    %v717 = vpack.c.bf16 %v701, %v701
    %v718 = vpack.c.bf16 %v702, %v702
    %v719 = vpack.c.bf16 %v703, %v703
    %v720 = vpack.c.bf16 %v704, %v704
    %v721 = vpack.c.bf16 %v705, %v705
    %v722 = vpack.c.bf16 %v706, %v706
    %v723 = vpack.c.bf16 %v707, %v707
    %v724 = vpack.c.bf16 %v708, %v708
    %v725 = vpack.c.bf16 %v709, %v709
    %v726 = vpack.c.bf16 %v710, %v710
    %v727 = vpack.c.bf16 %v711, %v711
    %v728 = vpack.c.bf16 %v712, %v712
    %v729 = vpack.c.bf16 %v713, %v713
    %v730 = vld [vmem:[#allocation8] sm:$0xf]
    %v731 = vld [vmem:[#allocation8 + $0x4] sm:$0xf]
    %v732 = vld [vmem:[#allocation8 + $0x8] sm:$0xf]
    %v733 = vld [vmem:[#allocation8 + $0xc] sm:$0xf]
    %v734 = vld [vmem:[#allocation8 + $0x10] sm:$0xf]
    %v735 = vld [vmem:[#allocation8 + $0x14] sm:$0xf]
    %v736 = vld [vmem:[#allocation8 + $0x18] sm:$0xf]
    %v737 = vld [vmem:[#allocation8 + $0x1c] sm:$0xf]
    %v738 = vld [vmem:[#allocation8 + $0x20] sm:$0xf]
    %v739 = vld [vmem:[#allocation8 + $0x24] sm:$0xf]
    %v740 = vld [vmem:[#allocation8 + $0x28] sm:$0xf]
    %v741 = vld [vmem:[#allocation8 + $0x2c] sm:$0xf]
    %v742 = vld [vmem:[#allocation8 + $0x30] sm:$0xf]
    %v743 = vld [vmem:[#allocation8 + $0x34] sm:$0xf]
    %v744 = vld [vmem:[#allocation8 + $0x38] sm:$0xf]
    %v745 = vld [vmem:[#allocation8 + $0x3c] sm:$0xf]
    %v746 = vld [vmem:[#allocation8 + $0x40] sm:$0xf]
    %v747 = vld [vmem:[#allocation8 + $0x44] sm:$0xf]
    %v748 = vld [vmem:[#allocation8 + $0x48] sm:$0xf]
    %v749 = vld [vmem:[#allocation8 + $0x4c] sm:$0xf]
    %v750 = vld [vmem:[#allocation8 + $0x50] sm:$0xf]
    %v751 = vld [vmem:[#allocation8 + $0x54] sm:$0xf]
    %v752 = vld [vmem:[#allocation8 + $0x58] sm:$0xf]
    %v753 = vld [vmem:[#allocation8 + $0x5c] sm:$0xf]
    %v754 = vld [vmem:[#allocation8 + $0x60] sm:$0xf]
    %v755 = vld [vmem:[#allocation8 + $0x64] sm:$0xf]
    %v756 = vld [vmem:[#allocation8 + $0x68] sm:$0xf]
    %v757 = vld [vmem:[#allocation8 + $0x6c] sm:$0xf]
    %v758 = vld [vmem:[#allocation8 + $0x70] sm:$0xf]
    %v759 = vld [vmem:[#allocation8 + $0x74] sm:$0xf]
    %v760 = vld [vmem:[#allocation8 + $0x78] sm:$0xf]
    %v761 = vld [vmem:[#allocation8 + $0x7c] sm:$0xf]
    %v762 = vld [vmem:[#allocation8 + $0x80] sm:$0xf]
    %v763 = vld [vmem:[#allocation8 + $0x84] sm:$0xf]
    %v764 = vld [vmem:[#allocation8 + $0x88] sm:$0xf]
    %v765 = vld [vmem:[#allocation8 + $0x8c] sm:$0xf]
    %v766 = vld [vmem:[#allocation8 + $0x90] sm:$0xf]
    %v767 = vld [vmem:[#allocation8 + $0x94] sm:$0xf]
    %v768 = vld [vmem:[#allocation8 + $0x98] sm:$0xf]
    %v769 = vld [vmem:[#allocation8 + $0x9c] sm:$0xf]
    %v770 = vld [vmem:[#allocation8 + $0xa0] sm:$0xf]
    %v771 = vld [vmem:[#allocation8 + $0xa4] sm:$0xf]
    %v772 = vld [vmem:[#allocation8 + $0xa8] sm:$0xf]
    %v773 = vld [vmem:[#allocation8 + $0xac] sm:$0xf]
    %v774 = vld [vmem:[#allocation8 + $0xb0] sm:$0xf]
    %v775 = vld [vmem:[#allocation8 + $0xb4] sm:$0xf]
    %v776 = vld [vmem:[#allocation8 + $0xb8] sm:$0xf]
    %v777 = vld [vmem:[#allocation8 + $0xbc] sm:$0xf]
    %v778 = vld [vmem:[#allocation8 + $0xc0] sm:$0xf]
    %v779 = vld [vmem:[#allocation8 + $0xc4] sm:$0xf]
    %v780 = vld [vmem:[#allocation8 + $0xc8] sm:$0xf]
    %v781 = vld [vmem:[#allocation8 + $0xcc] sm:$0xf]
    %v782 = vld [vmem:[#allocation8 + $0xd0] sm:$0xf]
    %v783 = vld [vmem:[#allocation8 + $0xd4] sm:$0xf]
    %v784 = vld [vmem:[#allocation8 + $0xd8] sm:$0xf]
    %v785 = vld [vmem:[#allocation8 + $0xdc] sm:$0xf]
    %v786 = vld [vmem:[#allocation8 + $0xe0] sm:$0xf]
    %v787 = vld [vmem:[#allocation8 + $0xe4] sm:$0xf]
    %v788 = vld [vmem:[#allocation8 + $0xe8] sm:$0xf]
    %v789 = vld [vmem:[#allocation8 + $0xec] sm:$0xf]
    %v790 = vld [vmem:[#allocation8 + $0xf0] sm:$0xf]
    %v791 = vld [vmem:[#allocation8 + $0xf4] sm:$0xf]
    %v792 = vld [vmem:[#allocation8 + $0xf8] sm:$0xf]
    %v793 = vld [vmem:[#allocation8 + $0xfc] sm:$0xf]
    %v794 = vld [vmem:[#allocation8 + $0x100] sm:$0xf]
    %v795 = vld [vmem:[#allocation8 + $0x104] sm:$0xf]
    %v796 = vld [vmem:[#allocation8 + $0x108] sm:$0xf]
    %v797 = vld [vmem:[#allocation8 + $0x10c] sm:$0xf]
    %v798 = vld [vmem:[#allocation8 + $0x110] sm:$0xf]
    %v799 = vld [vmem:[#allocation8 + $0x114] sm:$0xf]
    %v800 = vld [vmem:[#allocation8 + $0x118] sm:$0xf]
    %v801 = vld [vmem:[#allocation8 + $0x11c] sm:$0xf]
    %v802 = vld [vmem:[#allocation8 + $0x120] sm:$0xf]
    %v803 = vld [vmem:[#allocation8 + $0x124] sm:$0xf]
    %v804 = vld [vmem:[#allocation8 + $0x128] sm:$0xf]
    %v805 = vld [vmem:[#allocation8 + $0x12c] sm:$0xf]
    %v806 = vld [vmem:[#allocation8 + $0x130] sm:$0xf]
    %v807 = vld [vmem:[#allocation8 + $0x134] sm:$0xf]
    %v808 = vld [vmem:[#allocation8 + $0x138] sm:$0xf]
    %v809 = vld [vmem:[#allocation8 + $0x13c] sm:$0xf]
    %v810 = vld [vmem:[#allocation8 + $0x140] sm:$0xf]
    %v811 = vld [vmem:[#allocation8 + $0x144] sm:$0xf]
    %v812 = vld [vmem:[#allocation8 + $0x148] sm:$0xf]
    %v813 = vld [vmem:[#allocation8 + $0x14c] sm:$0xf]
    %v814 = vld [vmem:[#allocation8 + $0x150] sm:$0xf]
    %v815 = vld [vmem:[#allocation8 + $0x154] sm:$0xf]
    %v816 = vld [vmem:[#allocation8 + $0x158] sm:$0xf]
    %v817 = vld [vmem:[#allocation8 + $0x15c] sm:$0xf]
    %v818 = vld [vmem:[#allocation8 + $0x160] sm:$0xf]
    %v819 = vld [vmem:[#allocation8 + $0x164] sm:$0xf]
    %v820 = vld [vmem:[#allocation8 + $0x168] sm:$0xf]
    %v821 = vld [vmem:[#allocation8 + $0x16c] sm:$0xf]
    %v822 = vld [vmem:[#allocation8 + $0x170] sm:$0xf]
    %v823 = vld [vmem:[#allocation8 + $0x174] sm:$0xf]
    %v824 = vld [vmem:[#allocation8 + $0x178] sm:$0xf]
    %v825 = vld [vmem:[#allocation8 + $0x17c] sm:$0xf]
    %v826 = vld [vmem:[#allocation8 + $0x180] sm:$0xf]
    %v827 = vld [vmem:[#allocation8 + $0x184] sm:$0xf]
    %v828 = vld [vmem:[#allocation8 + $0x188] sm:$0xf]
    %v829 = vld [vmem:[#allocation8 + $0x18c] sm:$0xf]
    %v830 = vld [vmem:[#allocation8 + $0x190] sm:$0xf]
    %v831 = vld [vmem:[#allocation8 + $0x194] sm:$0xf]
    %v832 = vld [vmem:[#allocation8 + $0x198] sm:$0xf]
    %v833 = vld [vmem:[#allocation8 + $0x19c] sm:$0xf]
    %v834 = vld [vmem:[#allocation8 + $0x1a0] sm:$0xf]
    %v835 = vld [vmem:[#allocation8 + $0x1a4] sm:$0xf]
    %v836 = vld [vmem:[#allocation8 + $0x1a8] sm:$0xf]
    %v837 = vld [vmem:[#allocation8 + $0x1ac] sm:$0xf]
    %v838 = vld [vmem:[#allocation8 + $0x1b0] sm:$0xf]
    %v839 = vld [vmem:[#allocation8 + $0x1b4] sm:$0xf]
    %v840 = vld [vmem:[#allocation8 + $0x1b8] sm:$0xf]
    %v841 = vld [vmem:[#allocation8 + $0x1bc] sm:$0xf]
    %v842 = vld [vmem:[#allocation8 + $0x1c0] sm:$0xf]
    %v843 = vld [vmem:[#allocation8 + $0x1c4] sm:$0xf]
    %v844 = vld [vmem:[#allocation8 + $0x1c8] sm:$0xf]
    %v845 = vld [vmem:[#allocation8 + $0x1cc] sm:$0xf]
    %v846 = vld [vmem:[#allocation8 + $0x1d0] sm:$0xf]
    %v847 = vld [vmem:[#allocation8 + $0x1d4] sm:$0xf]
    %v848 = vld [vmem:[#allocation8 + $0x1d8] sm:$0xf]
    %v849 = vld [vmem:[#allocation8 + $0x1dc] sm:$0xf]
    %v850 = vld [vmem:[#allocation8 + $0x1e0] sm:$0xf]
    %v851 = vld [vmem:[#allocation8 + $0x1e4] sm:$0xf]
    %v852 = vld [vmem:[#allocation8 + $0x1e8] sm:$0xf]
    %v853 = vld [vmem:[#allocation8 + $0x1ec] sm:$0xf]
    %v854 = vld [vmem:[#allocation8 + $0x1f0] sm:$0xf]
    %v855 = vld [vmem:[#allocation8 + $0x1f4] sm:$0xf]
    %v856 = vld [vmem:[#allocation8 + $0x1f8] sm:$0xf]
    %v857 = vld [vmem:[#allocation8 + $0x1fc] sm:$0xf]
    %v858 = vld [vmem:[#allocation8 + $0x200] sm:$0xf]
    %v859 = vld [vmem:[#allocation8 + $0x204] sm:$0xf]
    %v860 = vld [vmem:[#allocation8 + $0x208] sm:$0xf]
    %v861 = vld [vmem:[#allocation8 + $0x20c] sm:$0xf]
    %v862 = vld [vmem:[#allocation8 + $0x210] sm:$0xf]
    %v863 = vld [vmem:[#allocation8 + $0x214] sm:$0xf]
    %v864 = vld [vmem:[#allocation8 + $0x218] sm:$0xf]
    %v865 = vld [vmem:[#allocation8 + $0x21c] sm:$0xf]
    %v866 = vld [vmem:[#allocation8 + $0x220] sm:$0xf]
    %v867 = vld [vmem:[#allocation8 + $0x224] sm:$0xf]
    %v868 = vld [vmem:[#allocation8 + $0x228] sm:$0xf]
    %v869 = vld [vmem:[#allocation8 + $0x22c] sm:$0xf]
    %v870 = vld [vmem:[#allocation8 + $0x230] sm:$0xf]
    %v871 = vld [vmem:[#allocation8 + $0x234] sm:$0xf]
    %v872 = vld [vmem:[#allocation8 + $0x238] sm:$0xf]
    %v873 = vld [vmem:[#allocation8 + $0x23c] sm:$0xf]
    %v874 = vld [vmem:[#allocation8 + $0x240] sm:$0xf]
    %v875 = vld [vmem:[#allocation8 + $0x244] sm:$0xf]
    %v876 = vld [vmem:[#allocation8 + $0x248] sm:$0xf]
    %v877 = vld [vmem:[#allocation8 + $0x24c] sm:$0xf]
    %v878 = vld [vmem:[#allocation8 + $0x250] sm:$0xf]
    %v879 = vld [vmem:[#allocation8 + $0x254] sm:$0xf]
    %v880 = vld [vmem:[#allocation8 + $0x258] sm:$0xf]
    %v881 = vld [vmem:[#allocation8 + $0x25c] sm:$0xf]
    %v882 = vld [vmem:[#allocation8 + $0x260] sm:$0xf]
    %v883 = vld [vmem:[#allocation8 + $0x264] sm:$0xf]
    %v884 = vld [vmem:[#allocation8 + $0x268] sm:$0xf]
    %v885 = vld [vmem:[#allocation8 + $0x26c] sm:$0xf]
    %v886 = vld [vmem:[#allocation8 + $0x270] sm:$0xf]
    %v887 = vld [vmem:[#allocation8 + $0x274] sm:$0xf]
    %v888 = vld [vmem:[#allocation8 + $0x278] sm:$0xf]
    %v889 = vld [vmem:[#allocation8 + $0x27c] sm:$0xf]
    %v890 = vld [vmem:[#allocation8 + $0x280] sm:$0xf]
    %v891 = vld [vmem:[#allocation8 + $0x284] sm:$0xf]
    %v892 = vld [vmem:[#allocation8 + $0x288] sm:$0xf]
    %v893 = vld [vmem:[#allocation8 + $0x28c] sm:$0xf]
    %v894 = vld [vmem:[#allocation8 + $0x290] sm:$0xf]
    %v895 = vld [vmem:[#allocation8 + $0x294] sm:$0xf]
    %v896 = vld [vmem:[#allocation8 + $0x298] sm:$0xf]
    %v897 = vld [vmem:[#allocation8 + $0x29c] sm:$0xf]
    %v898 = vld [vmem:[#allocation8 + $0x2a0] sm:$0xf]
    %v899 = vld [vmem:[#allocation8 + $0x2a4] sm:$0xf]
    %v900 = vld [vmem:[#allocation8 + $0x2a8] sm:$0xf]
    %v901 = vld [vmem:[#allocation8 + $0x2ac] sm:$0xf]
    %v902 = vld [vmem:[#allocation8 + $0x2b0] sm:$0xf]
    %v903 = vld [vmem:[#allocation8 + $0x2b4] sm:$0xf]
    %v904 = vld [vmem:[#allocation8 + $0x2b8] sm:$0xf]
    %v905 = vld [vmem:[#allocation8 + $0x2bc] sm:$0xf]
    %v906 = vld [vmem:[#allocation8 + $0x2c0] sm:$0xf]
    %v907 = vld [vmem:[#allocation8 + $0x2c4] sm:$0xf]
    %v908 = vld [vmem:[#allocation8 + $0x2c8] sm:$0xf]
    %v909 = vld [vmem:[#allocation8 + $0x2cc] sm:$0xf]
    %v910 = vld [vmem:[#allocation8 + $0x2d0] sm:$0xf]
    %v911 = vld [vmem:[#allocation8 + $0x2d4] sm:$0xf]
    %v912 = vld [vmem:[#allocation8 + $0x2d8] sm:$0xf]
    %v913 = vld [vmem:[#allocation8 + $0x2dc] sm:$0xf]
    %v914 = vld [vmem:[#allocation8 + $0x2e0] sm:$0xf]
    %v915 = vld [vmem:[#allocation8 + $0x2e4] sm:$0xf]
    %v916 = vld [vmem:[#allocation8 + $0x2e8] sm:$0xf]
    %v917 = vld [vmem:[#allocation8 + $0x2ec] sm:$0xf]
    %v918 = vld [vmem:[#allocation8 + $0x2f0] sm:$0xf]
    %v919 = vld [vmem:[#allocation8 + $0x2f4] sm:$0xf]
    %v920 = vld [vmem:[#allocation8 + $0x2f8] sm:$0xf]
    %v921 = vld [vmem:[#allocation8 + $0x2fc] sm:$0xf]
    %v922 = vld [vmem:[#allocation8 + $0x300] sm:$0xf]
    %v923 = vld [vmem:[#allocation8 + $0x304] sm:$0xf]
    %v924 = vld [vmem:[#allocation8 + $0x308] sm:$0xf]
    %v925 = vld [vmem:[#allocation8 + $0x30c] sm:$0xf]
    %v926 = vld [vmem:[#allocation8 + $0x310] sm:$0xf]
    %v927 = vld [vmem:[#allocation8 + $0x314] sm:$0xf]
    %v928 = vld [vmem:[#allocation8 + $0x318] sm:$0xf]
    %v929 = vld [vmem:[#allocation8 + $0x31c] sm:$0xf]
    %v930 = vld [vmem:[#allocation8 + $0x320] sm:$0xf]
    %v931 = vld [vmem:[#allocation8 + $0x324] sm:$0xf]
    %v932 = vld [vmem:[#allocation8 + $0x328] sm:$0xf]
    %v933 = vld [vmem:[#allocation8 + $0x32c] sm:$0xf]
    %v934 = vld [vmem:[#allocation8 + $0x330] sm:$0xf]
    %v935 = vld [vmem:[#allocation8 + $0x334] sm:$0xf]
    %v936 = vld [vmem:[#allocation8 + $0x338] sm:$0xf]
    %v937 = vld [vmem:[#allocation8 + $0x33c] sm:$0xf]
    %v938 = vld [vmem:[#allocation8 + $0x340] sm:$0xf]
    %v939 = vld [vmem:[#allocation8 + $0x344] sm:$0xf]
    %v940 = vld [vmem:[#allocation8 + $0x348] sm:$0xf]
    %v941 = vld [vmem:[#allocation8 + $0x34c] sm:$0xf]
    %v942 = vld [vmem:[#allocation8 + $0x350] sm:$0xf]
    %v943 = vld [vmem:[#allocation8 + $0x354] sm:$0xf]
    %v944 = vld [vmem:[#allocation8 + $0x358] sm:$0xf]
    %v945 = vld [vmem:[#allocation8 + $0x35c] sm:$0xf]
    %v946 = vld [vmem:[#allocation8 + $0x360] sm:$0xf]
    %v947 = vld [vmem:[#allocation8 + $0x364] sm:$0xf]
    %v948 = vld [vmem:[#allocation8 + $0x368] sm:$0xf]
    %v949 = vld [vmem:[#allocation8 + $0x36c] sm:$0xf]
    %v950 = vld [vmem:[#allocation8 + $0x370] sm:$0xf]
    %v951 = vld [vmem:[#allocation8 + $0x374] sm:$0xf]
    %v952 = vld [vmem:[#allocation8 + $0x378] sm:$0xf]
    %v953 = vld [vmem:[#allocation8 + $0x37c] sm:$0xf]
    %v954 = vld [vmem:[#allocation8 + $0x380] sm:$0xf]
    %v955 = vld [vmem:[#allocation8 + $0x384] sm:$0xf]
    %v956 = vld [vmem:[#allocation8 + $0x388] sm:$0xf]
    %v957 = vld [vmem:[#allocation8 + $0x38c] sm:$0xf]
    %v958 = vld [vmem:[#allocation8 + $0x390] sm:$0xf]
    %v959 = vld [vmem:[#allocation8 + $0x394] sm:$0xf]
    %v960 = vld [vmem:[#allocation8 + $0x398] sm:$0xf]
    %v961 = vld [vmem:[#allocation8 + $0x39c] sm:$0xf]
    %v962 = vld [vmem:[#allocation8 + $0x3a0] sm:$0xf]
    %v963 = vld [vmem:[#allocation8 + $0x3a4] sm:$0xf]
    %v964 = vld [vmem:[#allocation8 + $0x3a8] sm:$0xf]
    %v965 = vld [vmem:[#allocation8 + $0x3ac] sm:$0xf]
    %v966 = vld [vmem:[#allocation8 + $0x3b0] sm:$0xf]
    %v967 = vld [vmem:[#allocation8 + $0x3b4] sm:$0xf]
    %v968 = vld [vmem:[#allocation8 + $0x3b8] sm:$0xf]
    %v969 = vld [vmem:[#allocation8 + $0x3bc] sm:$0xf]
    %v970 = vld [vmem:[#allocation8 + $0x3c0] sm:$0xf]
    %v971 = vld [vmem:[#allocation8 + $0x3c4] sm:$0xf]
    %v972 = vld [vmem:[#allocation8 + $0x3c8] sm:$0xf]
    %v973 = vld [vmem:[#allocation8 + $0x3cc] sm:$0xf]
    %v974 = vld [vmem:[#allocation8 + $0x3d0] sm:$0xf]
    %v975 = vld [vmem:[#allocation8 + $0x3d4] sm:$0xf]
    %v976 = vld [vmem:[#allocation8 + $0x3d8] sm:$0xf]
    %v977 = vld [vmem:[#allocation8 + $0x3dc] sm:$0xf]
    %v978 = vld [vmem:[#allocation8 + $0x3e0] sm:$0xf]
    %v979 = vld [vmem:[#allocation8 + $0x3e4] sm:$0xf]
    %v980 = vld [vmem:[#allocation8 + $0x3e8] sm:$0xf]
    %v981 = vld [vmem:[#allocation8 + $0x3ec] sm:$0xf]
    %v982 = vld [vmem:[#allocation8 + $0x3f0] sm:$0xf]
    %v983 = vld [vmem:[#allocation8 + $0x3f4] sm:$0xf]
    %v984 = vld [vmem:[#allocation8 + $0x3f8] sm:$0xf]
    %v985 = vld [vmem:[#allocation8 + $0x3fc] sm:$0xf]
    %v986 = vld [vmem:[%s4] sm:$0x1]
    %v988 = vlaneseq
    %v989 = vshrl.u32 %v988, 7
    %v990 = vsub.s32 0, %v989
    %v991 = vrot.slane %v986, %v990
    %v1249 = vunpack.c.l.b16 %v730
    %v1250 = vunpack.c.l.b16 %v731
    %v1251 = vunpack.c.l.b16 %v732
    %v1252 = vunpack.c.l.b16 %v733
    %v1253 = vunpack.c.l.b16 %v734
    %v1254 = vunpack.c.l.b16 %v735
    %v1255 = vunpack.c.l.b16 %v736
    %v1256 = vunpack.c.l.b16 %v737
    %v1257 = vunpack.c.l.b16 %v738
    %v1258 = vunpack.c.l.b16 %v739
    %v1259 = vunpack.c.l.b16 %v740
    %v1260 = vunpack.c.l.b16 %v741
    %v1261 = vunpack.c.l.b16 %v742
    %v1262 = vunpack.c.l.b16 %v743
    %v1263 = vunpack.c.l.b16 %v744
    %v1264 = vunpack.c.l.b16 %v745
    %v1265 = vunpack.c.l.b16 %v746
    %v1266 = vunpack.c.l.b16 %v747
    %v1267 = vunpack.c.l.b16 %v748
    %v1268 = vunpack.c.l.b16 %v749
    %v1269 = vunpack.c.l.b16 %v750
    %v1270 = vunpack.c.l.b16 %v751
    %v1271 = vunpack.c.l.b16 %v752
    %v1272 = vunpack.c.l.b16 %v753
    %v1273 = vunpack.c.l.b16 %v754
    %v1274 = vunpack.c.l.b16 %v755
    %v1275 = vunpack.c.l.b16 %v756
    %v1276 = vunpack.c.l.b16 %v757
    %v1277 = vunpack.c.l.b16 %v758
    %v1278 = vunpack.c.l.b16 %v759
    %v1279 = vunpack.c.l.b16 %v760
    %v1280 = vunpack.c.l.b16 %v761
    %v1281 = vunpack.c.l.b16 %v762
    %v1282 = vunpack.c.l.b16 %v763
    %v1283 = vunpack.c.l.b16 %v764
    %v1284 = vunpack.c.l.b16 %v765
    %v1285 = vunpack.c.l.b16 %v766
    %v1286 = vunpack.c.l.b16 %v767
    %v1287 = vunpack.c.l.b16 %v768
    %v1288 = vunpack.c.l.b16 %v769
    %v1289 = vunpack.c.l.b16 %v770
    %v1290 = vunpack.c.l.b16 %v771
    %v1291 = vunpack.c.l.b16 %v772
    %v1292 = vunpack.c.l.b16 %v773
    %v1293 = vunpack.c.l.b16 %v774
    %v1294 = vunpack.c.l.b16 %v775
    %v1295 = vunpack.c.l.b16 %v776
    %v1296 = vunpack.c.l.b16 %v777
    %v1297 = vunpack.c.l.b16 %v778
    %v1298 = vunpack.c.l.b16 %v779
    %v1299 = vunpack.c.l.b16 %v780
    %v1300 = vunpack.c.l.b16 %v781
    %v1301 = vunpack.c.l.b16 %v782
    %v1302 = vunpack.c.l.b16 %v783
    %v1303 = vunpack.c.l.b16 %v784
    %v1304 = vunpack.c.l.b16 %v785
    %v1305 = vunpack.c.l.b16 %v786
    %v1306 = vunpack.c.l.b16 %v787
    %v1307 = vunpack.c.l.b16 %v788
    %v1308 = vunpack.c.l.b16 %v789
    %v1309 = vunpack.c.l.b16 %v790
    %v1310 = vunpack.c.l.b16 %v791
    %v1311 = vunpack.c.l.b16 %v792
    %v1312 = vunpack.c.l.b16 %v793
    %v1313 = vunpack.c.l.b16 %v794
    %v1314 = vunpack.c.l.b16 %v795
    %v1315 = vunpack.c.l.b16 %v796
    %v1316 = vunpack.c.l.b16 %v797
    %v1317 = vunpack.c.l.b16 %v798
    %v1318 = vunpack.c.l.b16 %v799
    %v1319 = vunpack.c.l.b16 %v800
    %v1320 = vunpack.c.l.b16 %v801
    %v1321 = vunpack.c.l.b16 %v802
    %v1322 = vunpack.c.l.b16 %v803
    %v1323 = vunpack.c.l.b16 %v804
    %v1324 = vunpack.c.l.b16 %v805
    %v1325 = vunpack.c.l.b16 %v806
    %v1326 = vunpack.c.l.b16 %v807
    %v1327 = vunpack.c.l.b16 %v808
    %v1328 = vunpack.c.l.b16 %v809
    %v1329 = vunpack.c.l.b16 %v810
    %v1330 = vunpack.c.l.b16 %v811
    %v1331 = vunpack.c.l.b16 %v812
    %v1332 = vunpack.c.l.b16 %v813
    %v1333 = vunpack.c.l.b16 %v814
    %v1334 = vunpack.c.l.b16 %v815
    %v1335 = vunpack.c.l.b16 %v816
    %v1336 = vunpack.c.l.b16 %v817
    %v1337 = vunpack.c.l.b16 %v818
    %v1338 = vunpack.c.l.b16 %v819
    %v1339 = vunpack.c.l.b16 %v820
    %v1340 = vunpack.c.l.b16 %v821
    %v1341 = vunpack.c.l.b16 %v822
    %v1342 = vunpack.c.l.b16 %v823
    %v1343 = vunpack.c.l.b16 %v824
    %v1344 = vunpack.c.l.b16 %v825
    %v1345 = vunpack.c.l.b16 %v826
    %v1346 = vunpack.c.l.b16 %v827
    %v1347 = vunpack.c.l.b16 %v828
    %v1348 = vunpack.c.l.b16 %v829
    %v1349 = vunpack.c.l.b16 %v830
    %v1350 = vunpack.c.l.b16 %v831
    %v1351 = vunpack.c.l.b16 %v832
    %v1352 = vunpack.c.l.b16 %v833
    %v1353 = vunpack.c.l.b16 %v834
    %v1354 = vunpack.c.l.b16 %v835
    %v1355 = vunpack.c.l.b16 %v836
    %v1356 = vunpack.c.l.b16 %v837
    %v1357 = vunpack.c.l.b16 %v838
    %v1358 = vunpack.c.l.b16 %v839
    %v1359 = vunpack.c.l.b16 %v840
    %v1360 = vunpack.c.l.b16 %v841
    %v1361 = vunpack.c.l.b16 %v842
    %v1362 = vunpack.c.l.b16 %v843
    %v1363 = vunpack.c.l.b16 %v844
    %v1364 = vunpack.c.l.b16 %v845
    %v1365 = vunpack.c.l.b16 %v846
    %v1366 = vunpack.c.l.b16 %v847
    %v1367 = vunpack.c.l.b16 %v848
    %v1368 = vunpack.c.l.b16 %v849
    %v1369 = vunpack.c.l.b16 %v850
    %v1370 = vunpack.c.l.b16 %v851
    %v1371 = vunpack.c.l.b16 %v852
    %v1372 = vunpack.c.l.b16 %v853
    %v1373 = vunpack.c.l.b16 %v854
    %v1374 = vunpack.c.l.b16 %v855
    %v1375 = vunpack.c.l.b16 %v856
    %v1376 = vunpack.c.l.b16 %v857
    %v1377 = vunpack.c.l.b16 %v858
    %v1378 = vunpack.c.l.b16 %v859
    %v1379 = vunpack.c.l.b16 %v860
    %v1380 = vunpack.c.l.b16 %v861
    %v1381 = vunpack.c.l.b16 %v862
    %v1382 = vunpack.c.l.b16 %v863
    %v1383 = vunpack.c.l.b16 %v864
    %v1384 = vunpack.c.l.b16 %v865
    %v1385 = vunpack.c.l.b16 %v866
    %v1386 = vunpack.c.l.b16 %v867
    %v1387 = vunpack.c.l.b16 %v868
    %v1388 = vunpack.c.l.b16 %v869
    %v1389 = vunpack.c.l.b16 %v870
    %v1390 = vunpack.c.l.b16 %v871
    %v1391 = vunpack.c.l.b16 %v872
    %v1392 = vunpack.c.l.b16 %v873
    %v1393 = vunpack.c.l.b16 %v874
    %v1394 = vunpack.c.l.b16 %v875
    %v1395 = vunpack.c.l.b16 %v876
    %v1396 = vunpack.c.l.b16 %v877
    %v1397 = vunpack.c.l.b16 %v878
    %v1398 = vunpack.c.l.b16 %v879
    %v1399 = vunpack.c.l.b16 %v880
    %v1400 = vunpack.c.l.b16 %v881
    %v1401 = vunpack.c.l.b16 %v882
    %v1402 = vunpack.c.l.b16 %v883
    %v1403 = vunpack.c.l.b16 %v884
    %v1404 = vunpack.c.l.b16 %v885
    %v1405 = vunpack.c.l.b16 %v886
    %v1406 = vunpack.c.l.b16 %v887
    %v1407 = vunpack.c.l.b16 %v888
    %v1408 = vunpack.c.l.b16 %v889
    %v1409 = vunpack.c.l.b16 %v890
    %v1410 = vunpack.c.l.b16 %v891
    %v1411 = vunpack.c.l.b16 %v892
    %v1412 = vunpack.c.l.b16 %v893
    %v1413 = vunpack.c.l.b16 %v894
    %v1414 = vunpack.c.l.b16 %v895
    %v1415 = vunpack.c.l.b16 %v896
    %v1416 = vunpack.c.l.b16 %v897
    %v1417 = vunpack.c.l.b16 %v898
    %v1418 = vunpack.c.l.b16 %v899
    %v1419 = vunpack.c.l.b16 %v900
    %v1420 = vunpack.c.l.b16 %v901
    %v1421 = vunpack.c.l.b16 %v902
    %v1422 = vunpack.c.l.b16 %v903
    %v1423 = vunpack.c.l.b16 %v904
    %v1424 = vunpack.c.l.b16 %v905
    %v1425 = vunpack.c.l.b16 %v906
    %v1426 = vunpack.c.l.b16 %v907
    %v1427 = vunpack.c.l.b16 %v908
    %v1428 = vunpack.c.l.b16 %v909
    %v1429 = vunpack.c.l.b16 %v910
    %v1430 = vunpack.c.l.b16 %v911
    %v1431 = vunpack.c.l.b16 %v912
    %v1432 = vunpack.c.l.b16 %v913
    %v1433 = vunpack.c.l.b16 %v914
    %v1434 = vunpack.c.l.b16 %v915
    %v1435 = vunpack.c.l.b16 %v916
    %v1436 = vunpack.c.l.b16 %v917
    %v1437 = vunpack.c.l.b16 %v918
    %v1438 = vunpack.c.l.b16 %v919
    %v1439 = vunpack.c.l.b16 %v920
    %v1440 = vunpack.c.l.b16 %v921
    %v1441 = vunpack.c.l.b16 %v922
    %v1442 = vunpack.c.l.b16 %v923
    %v1443 = vunpack.c.l.b16 %v924
    %v1444 = vunpack.c.l.b16 %v925
    %v1445 = vunpack.c.l.b16 %v926
    %v1446 = vunpack.c.l.b16 %v927
    %v1447 = vunpack.c.l.b16 %v928
    %v1448 = vunpack.c.l.b16 %v929
    %v1449 = vunpack.c.l.b16 %v930
    %v1450 = vunpack.c.l.b16 %v931
    %v1451 = vunpack.c.l.b16 %v932
    %v1452 = vunpack.c.l.b16 %v933
    %v1453 = vunpack.c.l.b16 %v934
    %v1454 = vunpack.c.l.b16 %v935
    %v1455 = vunpack.c.l.b16 %v936
    %v1456 = vunpack.c.l.b16 %v937
    %v1457 = vunpack.c.l.b16 %v938
    %v1458 = vunpack.c.l.b16 %v939
    %v1459 = vunpack.c.l.b16 %v940
    %v1460 = vunpack.c.l.b16 %v941
    %v1461 = vunpack.c.l.b16 %v942
    %v1462 = vunpack.c.l.b16 %v943
    %v1463 = vunpack.c.l.b16 %v944
    %v1464 = vunpack.c.l.b16 %v945
    %v1465 = vunpack.c.l.b16 %v946
    %v1466 = vunpack.c.l.b16 %v947
    %v1467 = vunpack.c.l.b16 %v948
    %v1468 = vunpack.c.l.b16 %v949
    %v1469 = vunpack.c.l.b16 %v950
    %v1470 = vunpack.c.l.b16 %v951
    %v1471 = vunpack.c.l.b16 %v952
    %v1472 = vunpack.c.l.b16 %v953
    %v1473 = vunpack.c.l.b16 %v954
    %v1474 = vunpack.c.l.b16 %v955
    %v1475 = vunpack.c.l.b16 %v956
    %v1476 = vunpack.c.l.b16 %v957
    %v1477 = vunpack.c.l.b16 %v958
    %v1478 = vunpack.c.l.b16 %v959
    %v1479 = vunpack.c.l.b16 %v960
    %v1480 = vunpack.c.l.b16 %v961
    %v1481 = vunpack.c.l.b16 %v962
    %v1482 = vunpack.c.l.b16 %v963
    %v1483 = vunpack.c.l.b16 %v964
    %v1484 = vunpack.c.l.b16 %v965
    %v1485 = vunpack.c.l.b16 %v966
    %v1486 = vunpack.c.l.b16 %v967
    %v1487 = vunpack.c.l.b16 %v968
    %v1488 = vunpack.c.l.b16 %v969
    %v1489 = vunpack.c.l.b16 %v970
    %v1490 = vunpack.c.l.b16 %v971
    %v1491 = vunpack.c.l.b16 %v972
    %v1492 = vunpack.c.l.b16 %v973
    %v1493 = vunpack.c.l.b16 %v974
    %v1494 = vunpack.c.l.b16 %v975
    %v1495 = vunpack.c.l.b16 %v976
    %v1496 = vunpack.c.l.b16 %v977
    %v1497 = vunpack.c.l.b16 %v978
    %v1498 = vunpack.c.l.b16 %v979
    %v1499 = vunpack.c.l.b16 %v980
    %v1500 = vunpack.c.l.b16 %v981
    %v1501 = vunpack.c.l.b16 %v982
    %v1502 = vunpack.c.l.b16 %v983
    %v1503 = vunpack.c.l.b16 %v984
    %v1504 = vunpack.c.l.b16 %v985
    %v1505 = vpack.c.b16 %v1250, %v1249
    %v1506 = vpack.c.b16 %v1252, %v1251
    %v1507 = vpack.c.b16 %v1254, %v1253
    %v1508 = vpack.c.b16 %v1256, %v1255
    %v1509 = vpack.c.b16 %v1258, %v1257
    %v1510 = vpack.c.b16 %v1260, %v1259
    %v1511 = vpack.c.b16 %v1262, %v1261
    %v1512 = vpack.c.b16 %v1264, %v1263
    %v1513 = vpack.c.b16 %v1266, %v1265
    %v1514 = vpack.c.b16 %v1268, %v1267
    %v1515 = vpack.c.b16 %v1270, %v1269
    %v1516 = vpack.c.b16 %v1272, %v1271
    %v1517 = vpack.c.b16 %v1274, %v1273
    %v1518 = vpack.c.b16 %v1276, %v1275
    %v1519 = vpack.c.b16 %v1278, %v1277
    %v1520 = vpack.c.b16 %v1280, %v1279
    %v1521 = vpack.c.b16 %v1282, %v1281
    %v1522 = vpack.c.b16 %v1284, %v1283
    %v1523 = vpack.c.b16 %v1286, %v1285
    %v1524 = vpack.c.b16 %v1288, %v1287
    %v1525 = vpack.c.b16 %v1290, %v1289
    %v1526 = vpack.c.b16 %v1292, %v1291
    %v1527 = vpack.c.b16 %v1294, %v1293
    %v1528 = vpack.c.b16 %v1296, %v1295
    %v1529 = vpack.c.b16 %v1298, %v1297
    %v1530 = vpack.c.b16 %v1300, %v1299
    %v1531 = vpack.c.b16 %v1302, %v1301
    %v1532 = vpack.c.b16 %v1304, %v1303
    %v1533 = vpack.c.b16 %v1306, %v1305
    %v1534 = vpack.c.b16 %v1308, %v1307
    %v1535 = vpack.c.b16 %v1310, %v1309
    %v1536 = vpack.c.b16 %v1312, %v1311
    %v1537 = vpack.c.b16 %v1314, %v1313
    %v1538 = vpack.c.b16 %v1316, %v1315
    %v1539 = vpack.c.b16 %v1318, %v1317
    %v1540 = vpack.c.b16 %v1320, %v1319
    %v1541 = vpack.c.b16 %v1322, %v1321
    %v1542 = vpack.c.b16 %v1324, %v1323
    %v1543 = vpack.c.b16 %v1326, %v1325
    %v1544 = vpack.c.b16 %v1328, %v1327
    %v1545 = vpack.c.b16 %v1330, %v1329
    %v1546 = vpack.c.b16 %v1332, %v1331
    %v1547 = vpack.c.b16 %v1334, %v1333
    %v1548 = vpack.c.b16 %v1336, %v1335
    %v1549 = vpack.c.b16 %v1338, %v1337
    %v1550 = vpack.c.b16 %v1340, %v1339
    %v1551 = vpack.c.b16 %v1342, %v1341
    %v1552 = vpack.c.b16 %v1344, %v1343
    %v1553 = vpack.c.b16 %v1346, %v1345
    %v1554 = vpack.c.b16 %v1348, %v1347
    %v1555 = vpack.c.b16 %v1350, %v1349
    %v1556 = vpack.c.b16 %v1352, %v1351
    %v1557 = vpack.c.b16 %v1354, %v1353
    %v1558 = vpack.c.b16 %v1356, %v1355
    %v1559 = vpack.c.b16 %v1358, %v1357
    %v1560 = vpack.c.b16 %v1360, %v1359
    %v1561 = vpack.c.b16 %v1362, %v1361
    %v1562 = vpack.c.b16 %v1364, %v1363
    %v1563 = vpack.c.b16 %v1366, %v1365
    %v1564 = vpack.c.b16 %v1368, %v1367
    %v1565 = vpack.c.b16 %v1370, %v1369
    %v1566 = vpack.c.b16 %v1372, %v1371
    %v1567 = vpack.c.b16 %v1374, %v1373
    %v1568 = vpack.c.b16 %v1376, %v1375
    %v1569 = vpack.c.b16 %v1378, %v1377
    %v1570 = vpack.c.b16 %v1380, %v1379
    %v1571 = vpack.c.b16 %v1382, %v1381
    %v1572 = vpack.c.b16 %v1384, %v1383
    %v1573 = vpack.c.b16 %v1386, %v1385
    %v1574 = vpack.c.b16 %v1388, %v1387
    %v1575 = vpack.c.b16 %v1390, %v1389
    %v1576 = vpack.c.b16 %v1392, %v1391
    %v1577 = vpack.c.b16 %v1394, %v1393
    %v1578 = vpack.c.b16 %v1396, %v1395
    %v1579 = vpack.c.b16 %v1398, %v1397
    %v1580 = vpack.c.b16 %v1400, %v1399
    %v1581 = vpack.c.b16 %v1402, %v1401
    %v1582 = vpack.c.b16 %v1404, %v1403
    %v1583 = vpack.c.b16 %v1406, %v1405
    %v1584 = vpack.c.b16 %v1408, %v1407
    %v1585 = vpack.c.b16 %v1410, %v1409
    %v1586 = vpack.c.b16 %v1412, %v1411
    %v1587 = vpack.c.b16 %v1414, %v1413
    %v1588 = vpack.c.b16 %v1416, %v1415
    %v1589 = vpack.c.b16 %v1418, %v1417
    %v1590 = vpack.c.b16 %v1420, %v1419
    %v1591 = vpack.c.b16 %v1422, %v1421
    %v1592 = vpack.c.b16 %v1424, %v1423
    %v1593 = vpack.c.b16 %v1426, %v1425
    %v1594 = vpack.c.b16 %v1428, %v1427
    %v1595 = vpack.c.b16 %v1430, %v1429
    %v1596 = vpack.c.b16 %v1432, %v1431
    %v1597 = vpack.c.b16 %v1434, %v1433
    %v1598 = vpack.c.b16 %v1436, %v1435
    %v1599 = vpack.c.b16 %v1438, %v1437
    %v1600 = vpack.c.b16 %v1440, %v1439
    %v1601 = vpack.c.b16 %v1442, %v1441
    %v1602 = vpack.c.b16 %v1444, %v1443
    %v1603 = vpack.c.b16 %v1446, %v1445
    %v1604 = vpack.c.b16 %v1448, %v1447
    %v1605 = vpack.c.b16 %v1450, %v1449
    %v1606 = vpack.c.b16 %v1452, %v1451
    %v1607 = vpack.c.b16 %v1454, %v1453
    %v1608 = vpack.c.b16 %v1456, %v1455
    %v1609 = vpack.c.b16 %v1458, %v1457
    %v1610 = vpack.c.b16 %v1460, %v1459
    %v1611 = vpack.c.b16 %v1462, %v1461
    %v1612 = vpack.c.b16 %v1464, %v1463
    %v1613 = vpack.c.b16 %v1466, %v1465
    %v1614 = vpack.c.b16 %v1468, %v1467
    %v1615 = vpack.c.b16 %v1470, %v1469
    %v1616 = vpack.c.b16 %v1472, %v1471
    %v1617 = vpack.c.b16 %v1474, %v1473
    %v1618 = vpack.c.b16 %v1476, %v1475
    %v1619 = vpack.c.b16 %v1478, %v1477
    %v1620 = vpack.c.b16 %v1480, %v1479
    %v1621 = vpack.c.b16 %v1482, %v1481
    %v1622 = vpack.c.b16 %v1484, %v1483
    %v1623 = vpack.c.b16 %v1486, %v1485
    %v1624 = vpack.c.b16 %v1488, %v1487
    %v1625 = vpack.c.b16 %v1490, %v1489
    %v1626 = vpack.c.b16 %v1492, %v1491
    %v1627 = vpack.c.b16 %v1494, %v1493
    %v1628 = vpack.c.b16 %v1496, %v1495
    %v1629 = vpack.c.b16 %v1498, %v1497
    %v1630 = vpack.c.b16 %v1500, %v1499
    %v1631 = vpack.c.b16 %v1502, %v1501
    %v1632 = vpack.c.b16 %v1504, %v1503
    %1761 = vmatprep.subr.bf16.mxu0 0
    %1762 = vmatpush1.bf16.msra.mxu0 %v1512
    %1763 = vmatprep.subr.bf16.mxu0 0
    %1764 = vmatpush1.bf16.msra.mxu0 %v1511
    %1765 = vmatprep.subr.bf16.mxu0 0
    %1766 = vmatpush1.bf16.msra.mxu0 %v1510
    %1767 = vmatprep.subr.bf16.mxu0 0
    %1768 = vmatpush1.bf16.msra.mxu0 %v1509
    %1769 = vmatprep.subr.bf16.mxu0 0
    %1770 = vmatpush1.bf16.msra.mxu0 %v1508
    %1771 = vmatprep.subr.bf16.mxu0 0
    %1772 = vmatpush1.bf16.msra.mxu0 %v1507
    %1773 = vmatprep.subr.bf16.mxu0 0
    %1774 = vmatpush1.bf16.msra.mxu0 %v1506
    %1775 = vmatprep.subr.bf16.mxu0 0
    %1776 = vmatpush1.bf16.msra.mxu0 %v1505
    %1777 = vmatprep.subr.bf16.mxu0 0
    %1778 = vmatpush2.bf16.msra.mxu0 %v1520
    %1779 = vmatprep.subr.bf16.mxu0 0
    %1780 = vmatpush2.bf16.msra.mxu0 %v1519
    %1781 = vmatprep.subr.bf16.mxu0 0
    %1782 = vmatpush2.bf16.msra.mxu0 %v1518
    %1783 = vmatprep.subr.bf16.mxu0 0
    %1784 = vmatpush2.bf16.msra.mxu0 %v1517
    %1785 = vmatprep.subr.bf16.mxu0 0
    %1786 = vmatpush2.bf16.msra.mxu0 %v1516
    %1787 = vmatprep.subr.bf16.mxu0 0
    %1788 = vmatpush2.bf16.msra.mxu0 %v1515
    %1789 = vmatprep.subr.bf16.mxu0 0
    %1790 = vmatpush2.bf16.msra.mxu0 %v1514
    %1791 = vmatprep.subr.bf16.mxu0 0
    %1792 = vmatpush2.bf16.msra.mxu0 %v1513
    %1793 = vmatprep.mubr.bf16.mxu0 %v715
    %1794 = vmatmul.mubr.bf16.gmra.mxu0 %v714
    %v1795 = vpop.f32.mrf.mxu0
    %v1796 = vadd.f32 %v991, %v1795
    %v1797 = vpop.f32.mrf.mxu0
    %v1798 = vpop.f32.mrf.mxu0
    %v1799 = vpop.f32.mrf.mxu0
    %1800 = vdwg.mxu0
    %1801 = vmatprep.subr.bf16.mxu0 0
    %1802 = vmatpush1.bf16.msra.mxu0 %v1528
    %1803 = vmatprep.subr.bf16.mxu0 0
    %1804 = vmatpush1.bf16.msra.mxu0 %v1527
    %1805 = vmatprep.subr.bf16.mxu0 0
    %1806 = vmatpush1.bf16.msra.mxu0 %v1526
    %1807 = vmatprep.subr.bf16.mxu0 0
    %1808 = vmatpush1.bf16.msra.mxu0 %v1525
    %1809 = vmatprep.subr.bf16.mxu0 0
    %1810 = vmatpush1.bf16.msra.mxu0 %v1524
    %1811 = vmatprep.subr.bf16.mxu0 0
    %1812 = vmatpush1.bf16.msra.mxu0 %v1523
    %1813 = vmatprep.subr.bf16.mxu0 0
    %1814 = vmatpush1.bf16.msra.mxu0 %v1522
    %1815 = vmatprep.subr.bf16.mxu0 0
    %1816 = vmatpush1.bf16.msra.mxu0 %v1521
    %1817 = vmatprep.subr.bf16.mxu0 0
    %1818 = vmatpush2.bf16.msra.mxu0 %v1536
    %1819 = vmatprep.subr.bf16.mxu0 0
    %1820 = vmatpush2.bf16.msra.mxu0 %v1535
    %1821 = vmatprep.subr.bf16.mxu0 0
    %1822 = vmatpush2.bf16.msra.mxu0 %v1534
    %1823 = vmatprep.subr.bf16.mxu0 0
    %1824 = vmatpush2.bf16.msra.mxu0 %v1533
    %1825 = vmatprep.subr.bf16.mxu0 0
    %1826 = vmatpush2.bf16.msra.mxu0 %v1532
    %1827 = vmatprep.subr.bf16.mxu0 0
    %1828 = vmatpush2.bf16.msra.mxu0 %v1531
    %1829 = vmatprep.subr.bf16.mxu0 0
    %1830 = vmatpush2.bf16.msra.mxu0 %v1530
    %1831 = vmatprep.subr.bf16.mxu0 0
    %1832 = vmatpush2.bf16.msra.mxu0 %v1529
    %1833 = vmatprep.mubr.bf16.mxu0 %v717
    %1834 = vmatmul.mubr.bf16.gmra.mxu0 %v716
    %v1835 = vpop.f32.mrf.mxu0
    %v1836 = vadd.f32 %v1796, %v1835
    %v1837 = vpop.f32.mrf.mxu0
    %v1838 = vpop.f32.mrf.mxu0
    %v1839 = vpop.f32.mrf.mxu0
    %1840 = vdwg.mxu0
    %1841 = vmatprep.subr.bf16.mxu0 0
    %1842 = vmatpush1.bf16.msra.mxu0 %v1544
    %1843 = vmatprep.subr.bf16.mxu0 0
    %1844 = vmatpush1.bf16.msra.mxu0 %v1543
    %1845 = vmatprep.subr.bf16.mxu0 0
    %1846 = vmatpush1.bf16.msra.mxu0 %v1542
    %1847 = vmatprep.subr.bf16.mxu0 0
    %1848 = vmatpush1.bf16.msra.mxu0 %v1541
    %1849 = vmatprep.subr.bf16.mxu0 0
    %1850 = vmatpush1.bf16.msra.mxu0 %v1540
    %1851 = vmatprep.subr.bf16.mxu0 0
    %1852 = vmatpush1.bf16.msra.mxu0 %v1539
    %1853 = vmatprep.subr.bf16.mxu0 0
    %1854 = vmatpush1.bf16.msra.mxu0 %v1538
    %1855 = vmatprep.subr.bf16.mxu0 0
    %1856 = vmatpush1.bf16.msra.mxu0 %v1537
    %1857 = vmatprep.subr.bf16.mxu0 0
    %1858 = vmatpush2.bf16.msra.mxu0 %v1552
    %1859 = vmatprep.subr.bf16.mxu0 0
    %1860 = vmatpush2.bf16.msra.mxu0 %v1551
    %1861 = vmatprep.subr.bf16.mxu0 0
    %1862 = vmatpush2.bf16.msra.mxu0 %v1550
    %1863 = vmatprep.subr.bf16.mxu0 0
    %1864 = vmatpush2.bf16.msra.mxu0 %v1549
    %1865 = vmatprep.subr.bf16.mxu0 0
    %1866 = vmatpush2.bf16.msra.mxu0 %v1548
    %1867 = vmatprep.subr.bf16.mxu0 0
    %1868 = vmatpush2.bf16.msra.mxu0 %v1547
    %1869 = vmatprep.subr.bf16.mxu0 0
    %1870 = vmatpush2.bf16.msra.mxu0 %v1546
    %1871 = vmatprep.subr.bf16.mxu0 0
    %1872 = vmatpush2.bf16.msra.mxu0 %v1545
    %1873 = vmatprep.mubr.bf16.mxu0 %v719
    %1874 = vmatmul.mubr.bf16.gmra.mxu0 %v718
    %v1875 = vpop.f32.mrf.mxu0
    %v1876 = vadd.f32 %v1836, %v1875
    %v1877 = vpop.f32.mrf.mxu0
    %v1878 = vpop.f32.mrf.mxu0
    %v1879 = vpop.f32.mrf.mxu0
    %1880 = vdwg.mxu0
    %1881 = vmatprep.subr.bf16.mxu0 0
    %1882 = vmatpush1.bf16.msra.mxu0 %v1560
    %1883 = vmatprep.subr.bf16.mxu0 0
    %1884 = vmatpush1.bf16.msra.mxu0 %v1559
    %1885 = vmatprep.subr.bf16.mxu0 0
    %1886 = vmatpush1.bf16.msra.mxu0 %v1558
    %1887 = vmatprep.subr.bf16.mxu0 0
    %1888 = vmatpush1.bf16.msra.mxu0 %v1557
    %1889 = vmatprep.subr.bf16.mxu0 0
    %1890 = vmatpush1.bf16.msra.mxu0 %v1556
    %1891 = vmatprep.subr.bf16.mxu0 0
    %1892 = vmatpush1.bf16.msra.mxu0 %v1555
    %1893 = vmatprep.subr.bf16.mxu0 0
    %1894 = vmatpush1.bf16.msra.mxu0 %v1554
    %1895 = vmatprep.subr.bf16.mxu0 0
    %1896 = vmatpush1.bf16.msra.mxu0 %v1553
    %1897 = vmatprep.subr.bf16.mxu0 0
    %1898 = vmatpush2.bf16.msra.mxu0 %v1568
    %1899 = vmatprep.subr.bf16.mxu0 0
    %1900 = vmatpush2.bf16.msra.mxu0 %v1567
    %1901 = vmatprep.subr.bf16.mxu0 0
    %1902 = vmatpush2.bf16.msra.mxu0 %v1566
    %1903 = vmatprep.subr.bf16.mxu0 0
    %1904 = vmatpush2.bf16.msra.mxu0 %v1565
    %1905 = vmatprep.subr.bf16.mxu0 0
    %1906 = vmatpush2.bf16.msra.mxu0 %v1564
    %1907 = vmatprep.subr.bf16.mxu0 0
    %1908 = vmatpush2.bf16.msra.mxu0 %v1563
    %1909 = vmatprep.subr.bf16.mxu0 0
    %1910 = vmatpush2.bf16.msra.mxu0 %v1562
    %1911 = vmatprep.subr.bf16.mxu0 0
    %1912 = vmatpush2.bf16.msra.mxu0 %v1561
    %1913 = vmatprep.mubr.bf16.mxu0 %v721
    %1914 = vmatmul.mubr.bf16.gmra.mxu0 %v720
    %v1915 = vpop.f32.mrf.mxu0
    %v1916 = vadd.f32 %v1876, %v1915
    %v1917 = vpop.f32.mrf.mxu0
    %v1918 = vpop.f32.mrf.mxu0
    %v1919 = vpop.f32.mrf.mxu0
    %1920 = vdwg.mxu0
    %1921 = vmatprep.subr.bf16.mxu0 0
    %1922 = vmatpush1.bf16.msra.mxu0 %v1576
    %1923 = vmatprep.subr.bf16.mxu0 0
    %1924 = vmatpush1.bf16.msra.mxu0 %v1575
    %1925 = vmatprep.subr.bf16.mxu0 0
    %1926 = vmatpush1.bf16.msra.mxu0 %v1574
    %1927 = vmatprep.subr.bf16.mxu0 0
    %1928 = vmatpush1.bf16.msra.mxu0 %v1573
    %1929 = vmatprep.subr.bf16.mxu0 0
    %1930 = vmatpush1.bf16.msra.mxu0 %v1572
    %1931 = vmatprep.subr.bf16.mxu0 0
    %1932 = vmatpush1.bf16.msra.mxu0 %v1571
    %1933 = vmatprep.subr.bf16.mxu0 0
    %1934 = vmatpush1.bf16.msra.mxu0 %v1570
    %1935 = vmatprep.subr.bf16.mxu0 0
    %1936 = vmatpush1.bf16.msra.mxu0 %v1569
    %1937 = vmatprep.subr.bf16.mxu0 0
    %1938 = vmatpush2.bf16.msra.mxu0 %v1584
    %1939 = vmatprep.subr.bf16.mxu0 0
    %1940 = vmatpush2.bf16.msra.mxu0 %v1583
    %1941 = vmatprep.subr.bf16.mxu0 0
    %1942 = vmatpush2.bf16.msra.mxu0 %v1582
    %1943 = vmatprep.subr.bf16.mxu0 0
    %1944 = vmatpush2.bf16.msra.mxu0 %v1581
    %1945 = vmatprep.subr.bf16.mxu0 0
    %1946 = vmatpush2.bf16.msra.mxu0 %v1580
    %1947 = vmatprep.subr.bf16.mxu0 0
    %1948 = vmatpush2.bf16.msra.mxu0 %v1579
    %1949 = vmatprep.subr.bf16.mxu0 0
    %1950 = vmatpush2.bf16.msra.mxu0 %v1578
    %1951 = vmatprep.subr.bf16.mxu0 0
    %1952 = vmatpush2.bf16.msra.mxu0 %v1577
    %1953 = vmatprep.mubr.bf16.mxu0 %v723
    %1954 = vmatmul.mubr.bf16.gmra.mxu0 %v722
    %v1955 = vpop.f32.mrf.mxu0
    %v1956 = vadd.f32 %v1916, %v1955
    %v1957 = vpop.f32.mrf.mxu0
    %v1958 = vpop.f32.mrf.mxu0
    %v1959 = vpop.f32.mrf.mxu0
    %1960 = vdwg.mxu0
    %1961 = vmatprep.subr.bf16.mxu0 0
    %1962 = vmatpush1.bf16.msra.mxu0 %v1592
    %1963 = vmatprep.subr.bf16.mxu0 0
    %1964 = vmatpush1.bf16.msra.mxu0 %v1591
    %1965 = vmatprep.subr.bf16.mxu0 0
    %1966 = vmatpush1.bf16.msra.mxu0 %v1590
    %1967 = vmatprep.subr.bf16.mxu0 0
    %1968 = vmatpush1.bf16.msra.mxu0 %v1589
    %1969 = vmatprep.subr.bf16.mxu0 0
    %1970 = vmatpush1.bf16.msra.mxu0 %v1588
    %1971 = vmatprep.subr.bf16.mxu0 0
    %1972 = vmatpush1.bf16.msra.mxu0 %v1587
    %1973 = vmatprep.subr.bf16.mxu0 0
    %1974 = vmatpush1.bf16.msra.mxu0 %v1586
    %1975 = vmatprep.subr.bf16.mxu0 0
    %1976 = vmatpush1.bf16.msra.mxu0 %v1585
    %1977 = vmatprep.subr.bf16.mxu0 0
    %1978 = vmatpush2.bf16.msra.mxu0 %v1600
    %1979 = vmatprep.subr.bf16.mxu0 0
    %1980 = vmatpush2.bf16.msra.mxu0 %v1599
    %1981 = vmatprep.subr.bf16.mxu0 0
    %1982 = vmatpush2.bf16.msra.mxu0 %v1598
    %1983 = vmatprep.subr.bf16.mxu0 0
    %1984 = vmatpush2.bf16.msra.mxu0 %v1597
    %1985 = vmatprep.subr.bf16.mxu0 0
    %1986 = vmatpush2.bf16.msra.mxu0 %v1596
    %1987 = vmatprep.subr.bf16.mxu0 0
    %1988 = vmatpush2.bf16.msra.mxu0 %v1595
    %1989 = vmatprep.subr.bf16.mxu0 0
    %1990 = vmatpush2.bf16.msra.mxu0 %v1594
    %1991 = vmatprep.subr.bf16.mxu0 0
    %1992 = vmatpush2.bf16.msra.mxu0 %v1593
    %1993 = vmatprep.mubr.bf16.mxu0 %v725
    %1994 = vmatmul.mubr.bf16.gmra.mxu0 %v724
    %v1995 = vpop.f32.mrf.mxu0
    %v1996 = vadd.f32 %v1956, %v1995
    %v1997 = vpop.f32.mrf.mxu0
    %v1998 = vpop.f32.mrf.mxu0
    %v1999 = vpop.f32.mrf.mxu0
    %2000 = vdwg.mxu0
    %2001 = vmatprep.subr.bf16.mxu0 0
    %2002 = vmatpush1.bf16.msra.mxu0 %v1608
    %2003 = vmatprep.subr.bf16.mxu0 0
    %2004 = vmatpush1.bf16.msra.mxu0 %v1607
    %2005 = vmatprep.subr.bf16.mxu0 0
    %2006 = vmatpush1.bf16.msra.mxu0 %v1606
    %2007 = vmatprep.subr.bf16.mxu0 0
    %2008 = vmatpush1.bf16.msra.mxu0 %v1605
    %2009 = vmatprep.subr.bf16.mxu0 0
    %2010 = vmatpush1.bf16.msra.mxu0 %v1604
    %2011 = vmatprep.subr.bf16.mxu0 0
    %2012 = vmatpush1.bf16.msra.mxu0 %v1603
    %2013 = vmatprep.subr.bf16.mxu0 0
    %2014 = vmatpush1.bf16.msra.mxu0 %v1602
    %2015 = vmatprep.subr.bf16.mxu0 0
    %2016 = vmatpush1.bf16.msra.mxu0 %v1601
    %2017 = vmatprep.subr.bf16.mxu0 0
    %2018 = vmatpush2.bf16.msra.mxu0 %v1616
    %2019 = vmatprep.subr.bf16.mxu0 0
    %2020 = vmatpush2.bf16.msra.mxu0 %v1615
    %2021 = vmatprep.subr.bf16.mxu0 0
    %2022 = vmatpush2.bf16.msra.mxu0 %v1614
    %2023 = vmatprep.subr.bf16.mxu0 0
    %2024 = vmatpush2.bf16.msra.mxu0 %v1613
    %2025 = vmatprep.subr.bf16.mxu0 0
    %2026 = vmatpush2.bf16.msra.mxu0 %v1612
    %2027 = vmatprep.subr.bf16.mxu0 0
    %2028 = vmatpush2.bf16.msra.mxu0 %v1611
    %2029 = vmatprep.subr.bf16.mxu0 0
    %2030 = vmatpush2.bf16.msra.mxu0 %v1610
    %2031 = vmatprep.subr.bf16.mxu0 0
    %2032 = vmatpush2.bf16.msra.mxu0 %v1609
    %2033 = vmatprep.mubr.bf16.mxu0 %v727
    %2034 = vmatmul.mubr.bf16.gmra.mxu0 %v726
    %v2035 = vpop.f32.mrf.mxu0
    %v2036 = vadd.f32 %v1996, %v2035
    %v2037 = vpop.f32.mrf.mxu0
    %v2038 = vpop.f32.mrf.mxu0
    %v2039 = vpop.f32.mrf.mxu0
    %2040 = vdwg.mxu0
    %2041 = vmatprep.subr.bf16.mxu0 0
    %2042 = vmatpush1.bf16.msra.mxu0 %v1624
    %2043 = vmatprep.subr.bf16.mxu0 0
    %2044 = vmatpush1.bf16.msra.mxu0 %v1623
    %2045 = vmatprep.subr.bf16.mxu0 0
    %2046 = vmatpush1.bf16.msra.mxu0 %v1622
    %2047 = vmatprep.subr.bf16.mxu0 0
    %2048 = vmatpush1.bf16.msra.mxu0 %v1621
    %2049 = vmatprep.subr.bf16.mxu0 0
    %2050 = vmatpush1.bf16.msra.mxu0 %v1620
    %2051 = vmatprep.subr.bf16.mxu0 0
    %2052 = vmatpush1.bf16.msra.mxu0 %v1619
    %2053 = vmatprep.subr.bf16.mxu0 0
    %2054 = vmatpush1.bf16.msra.mxu0 %v1618
    %2055 = vmatprep.subr.bf16.mxu0 0
    %2056 = vmatpush1.bf16.msra.mxu0 %v1617
    %2057 = vmatprep.subr.bf16.mxu0 0
    %2058 = vmatpush2.bf16.msra.mxu0 %v1632
    %2059 = vmatprep.subr.bf16.mxu0 0
    %2060 = vmatpush2.bf16.msra.mxu0 %v1631
    %2061 = vmatprep.subr.bf16.mxu0 0
    %2062 = vmatpush2.bf16.msra.mxu0 %v1630
    %2063 = vmatprep.subr.bf16.mxu0 0
    %2064 = vmatpush2.bf16.msra.mxu0 %v1629
    %2065 = vmatprep.subr.bf16.mxu0 0
    %2066 = vmatpush2.bf16.msra.mxu0 %v1628
    %2067 = vmatprep.subr.bf16.mxu0 0
    %2068 = vmatpush2.bf16.msra.mxu0 %v1627
    %2069 = vmatprep.subr.bf16.mxu0 0
    %2070 = vmatpush2.bf16.msra.mxu0 %v1626
    %2071 = vmatprep.subr.bf16.mxu0 0
    %2072 = vmatpush2.bf16.msra.mxu0 %v1625
    %2073 = vmatprep.mubr.bf16.mxu0 %v729
    %2074 = vmatmul.mubr.bf16.gmra.mxu0 %v728
    %v2075 = vpop.f32.mrf.mxu0
    %v2076 = vadd.f32 %v2036, %v2075
    %v2077 = vpop.f32.mrf.mxu0
    %v2078 = vpop.f32.mrf.mxu0
    %v2079 = vpop.f32.mrf.mxu0
    %2080 = vdwg.mxu0
    %2081 = vst [vmem:[#allocation10] sm:$0xff] %v2076
    // Predicated region
    $region38: #{tpu_custom_call.1} parent=1 // pred_check
      _
    $region39: #{tpu_custom_call.1} parent=1 // pred_check_branch
      %2083 = sbr.rel (0) target = $region41
    $region40: #{tpu_custom_call.1} parent=1 // pred_region
      %s2085 = ssub.s32 128, 128
      %2086 = vsyncadd [#allocation4], %s2085
      %s2088 = sshll.u32 [#allocation10], 4
      %s2089 = int_to_ptr.vmem [resolvable:$true] %s2088
      %2091 = dma.vmem_to_hbm [thread:$0]  %s2089, 128, %s5, [#allocation4]
    $region41: #{tpu_custom_call.1} parent=1 // pred_fallthru
      _
    // Predicated region
    $region42: #{tpu_custom_call.1} parent=1 // pred_check
      _
    $region43: #{tpu_custom_call.1} parent=1 // pred_check_branch
      %2093 = sbr.rel (0) target = $region45
    $region44: #{tpu_custom_call.1} parent=1 // pred_region
      %2094 = dma.done [#allocation4], 128
    $region45: #{tpu_custom_call.1} parent=1 // pred_fallthru
      _
    %2095 = vsyncpa [#allocation3], 1
    %2096 = vsyncpa [#allocation6], 1
    %2097 = vsyncpa [#allocation9], 1
    %2098 = vsyncpa [#allocation4], 1

</llo_original>
